<compile_context>
chip_gen: v5e
topology: v5e:2x2
jax: 0.10.0
libtpu: 0.0.40
codegen_flags: <defaults>
</compile_context>

<pallas_src>
import jax
import jax.numpy as jnp
import numpy as np
from jax.experimental import pallas as pl
from jax.experimental.pallas import tpu as pltpu

A_DIM = 6            # action dim (output width of each head)
S_LEN = 8            # s_dim[1]; forced by out_linear(2048, .) = 256+640+640+384+128
KC = 4               # Conv1d kernel size
H = 128              # hidden width of every branch
MERGED = 2048        # per-head merged feature width
K_FLAT = 6 * S_LEN   # 48 flattened input features (x.reshape(B, 48), channel-major)
OUT_PAD = 128        # lane-padded output width


# ----------------------------------------------------------------------------
# Fused kernel: two bf16 MXU matmuls + ReLU + masked log_softmax,
# two lane-dense [B, 128] f32 outputs.
# ----------------------------------------------------------------------------
def pen_q_kernel(xf_ref, w1_ref, b1_ref, wout_ref, bout_ref, o_ref, logp_ref):
    """Fused Pen_Q forward.

    xf_ref   : [B, 48]   f32   x.reshape(B, 48) (both heads share it)
    w1_ref   : [48, 4096] bf16 fused first layer (fc + im2col-as-matrix), 2 heads
    b1_ref   : [1, 4096]  f32
    wout_ref : [2048, 128] bf16 shared compact out_linear (cols 0:6 main, 6:12 i)
    bout_ref : [1, 128]   f32  (cols 0:6 main out_b, 6:12 i out_b)
    o_ref    : [B, 128]   f32  lanes 0:6 = logits, 6:12 = i
    logp_ref : [B, 128]   f32  lanes 6:12 = log_softmax(i); other lanes unused
    """
    xf = xf_ref[...].astype(jnp.bfloat16)                        # [B, 48]

    # Matmul 1 (bf16 MXU): every fc / conv piece of both heads at once.
    h = jnp.dot(xf, w1_ref[...], preferred_element_type=jnp.float32)
    h = jnp.maximum(h + b1_ref[...], 0.0)                        # [B, 4096] f32
    hb = h.astype(jnp.bfloat16)

    # Matmul 2 (bf16 MXU): shared compact out_linear, one dot per head.
    # The 2048 boundary is 128-lane aligned -> the slices stay views.
    wout = wout_ref[...]                                         # [2048, 128]
    o_main = jnp.dot(hb[:, :MERGED], wout, preferred_element_type=jnp.float32)
    o_i = jnp.dot(hb[:, MERGED:], wout, preferred_element_type=jnp.float32)

    b = o_main.shape[0]
    lane = jax.lax.broadcasted_iota(jnp.int32, (b, OUT_PAD), 1)
    # lanes 0:6 <- main head (logits); lanes 6:12 <- i head (i); rest are 0.
    o = jnp.where(lane < A_DIM, o_main, o_i) + bout_ref[...]     # [B, 128] f32
    o_ref[...] = o

    # log_softmax(i) over the full 128-lane row with the non-i lanes masked
    # to a large negative value (NOT zero) so they don't leak into logsumexp.
    i_mask = (lane >= A_DIM) & (lane < 2 * A_DIM)
    i_masked = jnp.where(i_mask, o, jnp.float32(-1e30))
    m = jnp.max(i_masked, axis=-1, keepdims=True)
    lse = jnp.log(jnp.sum(jnp.exp(i_masked - m), axis=-1, keepdims=True))
    logp_ref[...] = o - m - lse                                  # valid on 6:12


@jax.jit
def pen_q_forward(x, w1, b1, wout, bout):
    """Returns (logits, log_softmax(i), i) exactly like the PyTorch module."""
    B = x.shape[0]
    Bp = ((B + 7) // 8) * 8                 # pad batch to f32 sublane multiple
    xf = x.reshape(B, K_FLAT)               # free reshape; no slicing/concat/pad
    if Bp != B:
        xf = jnp.pad(xf, ((0, Bp - B), (0, 0)))

    vmem = pl.BlockSpec(memory_space=pltpu.MemorySpace.VMEM)
    o, logp = pl.pallas_call(
        pen_q_kernel,
        out_shape=(jax.ShapeDtypeStruct((Bp, OUT_PAD), jnp.float32),
                   jax.ShapeDtypeStruct((Bp, OUT_PAD), jnp.float32)),
        in_specs=[vmem] * 5,
        out_specs=(vmem, vmem),
    )(xf, w1, b1, wout, bout)

    logits = o[:B, 0:A_DIM]
    i_val = o[:B, A_DIM:2 * A_DIM]
    log_pi = logp[:B, A_DIM:2 * A_DIM]
    return logits, log_pi, i_val


# ----------------------------------------------------------------------------
# Parameter setup (deterministic, PyTorch-shaped) + one-time packing glue
# ----------------------------------------------------------------------------
def init_branch_params(key):
    ks = jax.random.split(key, 14)
    n = lambda k, shp: (jax.random.normal(k, shp, jnp.float32) * 0.1)
    return dict(
        fc1_w=n(ks[0], (H, 1)), fc1_b=n(ks[1], (H,)),
        fc2_w=n(ks[2], (H, 1)), fc2_b=n(ks[3], (H,)),
        fc3_w=n(ks[4], (H, 1)), fc3_b=n(ks[5], (H,)),
        conv1_w=n(ks[6], (H, 1, KC)), conv1_b=n(ks[7], (H,)),
        conv2_w=n(ks[8], (H, 1, KC)), conv2_b=n(ks[9], (H,)),
        conv3_w=n(ks[10], (H, 1, KC)), conv3_b=n(ks[11], (H,)),
        out_w=n(ks[12], (A_DIM, MERGED)), out_b=n(ks[13], (A_DIM,)),
    )


def _pack_conv(w, b, conv_w, conv_b, *, col0, in0, npos):
    """Write a Conv1d(1,128,k=4) as a dense sub-block of the first-layer
    weight. Merged column col0 + c*npos + t (PyTorch channel-major flatten)
    is driven by flattened-input rows in0+t .. in0+t+3."""
    hi = col0 + H * npos
    for t in range(npos):
        cols = slice(col0 + t, hi, npos)              # all 128 channels, pos t
        for k in range(KC):
            w[in0 + t + k, cols] = conv_w[:, 0, k]
        b[cols] = conv_b


def pack_first_layer(p):
    """One head's fc1/fc2/conv1/conv2/conv3/fc3 -> W1 [48, 2048], b1 [2048].
    Input rows are indexed by the flattened (channel*8 + position) layout of
    x.reshape(B, 48); output columns follow PyTorch's merge (cat +
    channel-major flatten) order, so out_linear weights are used unpermuted."""
    w = np.zeros((K_FLAT, MERGED), np.float32)
    b = np.zeros((MERGED,), np.float32)
    g = lambda name: (np.asarray(p[name + '_w'], np.float32),
                      np.asarray(p[name + '_b'], np.float32))
    fc1_w, fc1_b = g('fc1'); fc2_w, fc2_b = g('fc2'); fc3_w, fc3_b = g('fc3')
    c1_w, c1_b = g('conv1'); c2_w, c2_b = g('conv2'); c3_w, c3_b = g('conv3')

    w[0 * S_LEN + 7, 0:H] = fc1_w[:, 0];        b[0:H] = fc1_b       # split_0: x[:,0,-1]
    w[1 * S_LEN + 7, H:2 * H] = fc2_w[:, 0];    b[H:2 * H] = fc2_b   # split_1: x[:,1,-1]
    _pack_conv(w, b, c1_w, c1_b, col0=256, in0=2 * S_LEN, npos=5)    # split_2: x[:,2,:]
    _pack_conv(w, b, c2_w, c2_b, col0=896, in0=3 * S_LEN, npos=5)    # split_3: x[:,3,:]
    _pack_conv(w, b, c3_w, c3_b, col0=1536, in0=4 * S_LEN, npos=3)   # split_4: x[:,4,:6]
    w[5 * S_LEN + 7, 1920:2048] = fc3_w[:, 0];  b[1920:2048] = fc3_b  # split_5: x[:,5,-1]
    return w, b


def pack_params(p_main, p_i):
    w1_m, b1_m = pack_first_layer(p_main)
    w1_i, b1_i = pack_first_layer(p_i)
    w1 = np.concatenate([w1_m, w1_i], axis=1)                       # [48, 4096]
    b1 = np.concatenate([b1_m, b1_i])[None, :]                      # [1, 4096]

    # Shared compact out_linear: both heads use the SAME [2048, 128] matrix;
    # cols 0:6 hold the main head's out_w.T, cols 6:12 the i head's.
    wout = np.zeros((MERGED, OUT_PAD), np.float32)                  # [2048, 128]
    wout[:, 0:A_DIM] = np.asarray(p_main['out_w'], np.float32).T
    wout[:, A_DIM:2 * A_DIM] = np.asarray(p_i['out_w'], np.float32).T
    bout = np.zeros((1, OUT_PAD), np.float32)
    bout[0, 0:A_DIM] = np.asarray(p_main['out_b'], np.float32)
    bout[0, A_DIM:2 * A_DIM] = np.asarray(p_i['out_b'], np.float32)

    # bf16 weight storage (halves weight DMA; MXU native bf16 path).
    return (jnp.asarray(w1, jnp.bfloat16), jnp.asarray(b1, jnp.float32),
            jnp.asarray(wout, jnp.bfloat16), jnp.asarray(bout, jnp.float32))


# ----------------------------------------------------------------------------
# Pure-JAX f32 reference mirroring the PyTorch forward exactly
# ----------------------------------------------------------------------------
def reference_forward(x, p_main, p_i):
    def lin(v, w, b):
        return v @ w.T + b

    def conv1d(v, w, b):                      # v: [B, L], w: [128, 1, 4]
        npos = v.shape[1] - KC + 1
        cols = [v[:, t:t + KC] @ w[:, 0, :].T + b for t in range(npos)]
        return jnp.stack(cols, axis=2)        # [B, 128, npos]

    def branch(p):
        B = x.shape[0]
        s0 = jax.nn.relu(lin(x[:, 0, -1:], p['fc1_w'], p['fc1_b']))
        s1 = jax.nn.relu(lin(x[:, 1, -1:], p['fc2_w'], p['fc2_b']))
        s2 = jax.nn.relu(conv1d(x[:, 2, :], p['conv1_w'], p['conv1_b']))
        s3 = jax.nn.relu(conv1d(x[:, 3, :], p['conv2_w'], p['conv2_b']))
        s4 = jax.nn.relu(conv1d(x[:, 4, :A_DIM], p['conv3_w'], p['conv3_b']))
        s5 = jax.nn.relu(lin(x[:, 5, -1:], p['fc3_w'], p['fc3_b']))
        merge = jnp.concatenate([s0, s1,
                                 s2.reshape(B, -1), s3.reshape(B, -1),
                                 s4.reshape(B, -1), s5], axis=1)    # [B, 2048]
        return merge @ p['out_w'].T + p['out_b']

    logits = branch(p_main)
    i_val = branch(p_i)
    return logits, jax.nn.log_softmax(i_val, axis=1), i_val


if __name__ == "__main__":
    key = jax.random.PRNGKey(0)
    k_x, k_main, k_i = jax.random.split(key, 3)

    B = 8
    x = jax.random.normal(k_x, (B, 6, S_LEN), jnp.float32)   # [B, C=6, L=8]

    p_main = init_branch_params(k_main)
    p_i = init_branch_params(k_i)
    w1, b1, wout, bout = pack_params(p_main, p_i)

    logits, log_pi, i_val = jax.block_until_ready(
        pen_q_forward(x, w1, b1, wout, bout))

    r_logits, r_log_pi, r_i = reference_forward(x, p_main, p_i)

    # Tolerance covers bf16 weight/activation rounding on the MXU path
    # (expected noise ~1e-3 on O(1) outputs); any structural / permutation
    # bug produces O(0.3+) errors and still fails loudly.
    tol = dict(rtol=2e-2, atol=2e-2)
    np.testing.assert_allclose(np.asarray(logits), np.asarray(r_logits), **tol)
    np.testing.assert_allclose(np.asarray(i_val), np.asarray(r_i), **tol)
    np.testing.assert_allclose(np.asarray(log_pi), np.asarray(r_log_pi), **tol)

    print("KERNEL_OK")
</pallas_src>

<mosaic_0001>
module attributes {stable_mosaic.version = 11 : i64} {
  func.func @pen_q_kernel(%arg0: memref<8x48xf32, #tpu.memory_space<vmem>>, %arg1: memref<48x4096xbf16, #tpu.memory_space<vmem>>, %arg2: memref<1x4096xf32, #tpu.memory_space<vmem>>, %arg3: memref<2048x128xbf16, #tpu.memory_space<vmem>>, %arg4: memref<1x128xf32, #tpu.memory_space<vmem>>, %arg5: memref<8x128xf32, #tpu.memory_space<vmem>>, %arg6: memref<8x128xf32, #tpu.memory_space<vmem>>) attributes {dimension_semantics = [], scalar_prefetch = 0 : i64, scratch_operands = 0 : i64, tpu.core_type = #tpu.core_type<tc>} {
    %c0 = arith.constant 0 : index
    %c0_0 = arith.constant 0 : index
    %0 = vector.load %arg0[%c0, %c0_0] : memref<8x48xf32, #tpu.memory_space<vmem>>, vector<8x48xf32>
    %1 = arith.truncf %0 : vector<8x48xf32> to vector<8x48xbf16>
    %c0_1 = arith.constant 0 : index
    %c0_2 = arith.constant 0 : index
    %2 = vector.load %arg1[%c0_1, %c0_2] : memref<48x4096xbf16, #tpu.memory_space<vmem>>, vector<48x4096xbf16>
    %cst = arith.constant dense<0.000000e+00> : vector<8x4096xf32>
    %3 = tpu.matmul %1, %2, %cst {dimension_numbers = #tpu.dot_dimension_numbers<[1], [0], [0], [1], [0, 0, 1, 1], [], []>} : vector<8x48xbf16>, vector<48x4096xbf16>, vector<8x4096xf32> -> vector<8x4096xf32>
    %c0_3 = arith.constant 0 : index
    %c0_4 = arith.constant 0 : index
    %4 = vector.load %arg2[%c0_3, %c0_4] : memref<1x4096xf32, #tpu.memory_space<vmem>>, vector<1x4096xf32>
    %5 = vector.broadcast %4 : vector<1x4096xf32> to vector<8x4096xf32>
    %6 = arith.addf %3, %5 : vector<8x4096xf32>
    %cst_5 = arith.constant 0.000000e+00 : f32
    %7 = vector.broadcast %cst_5 : f32 to vector<8x4096xf32>
    %8 = arith.maximumf %6, %7 : vector<8x4096xf32>
    %9 = arith.truncf %8 : vector<8x4096xf32> to vector<8x4096xbf16>
    %c0_6 = arith.constant 0 : index
    %c0_7 = arith.constant 0 : index
    %10 = vector.load %arg3[%c0_6, %c0_7] : memref<2048x128xbf16, #tpu.memory_space<vmem>>, vector<2048x128xbf16>
    %11 = vector.extract_strided_slice %9 {offsets = [0, 0], sizes = [8, 2048], strides = [1, 1]} : vector<8x4096xbf16> to vector<8x2048xbf16>
    %cst_8 = arith.constant dense<0.000000e+00> : vector<8x128xf32>
    %12 = tpu.matmul %11, %10, %cst_8 {dimension_numbers = #tpu.dot_dimension_numbers<[1], [0], [0], [1], [0, 0, 1, 1], [], []>} : vector<8x2048xbf16>, vector<2048x128xbf16>, vector<8x128xf32> -> vector<8x128xf32>
    %13 = vector.extract_strided_slice %9 {offsets = [0, 2048], sizes = [8, 2048], strides = [1, 1]} : vector<8x4096xbf16> to vector<8x2048xbf16>
    %cst_9 = arith.constant dense<0.000000e+00> : vector<8x128xf32>
    %14 = tpu.matmul %13, %10, %cst_9 {dimension_numbers = #tpu.dot_dimension_numbers<[1], [0], [0], [1], [0, 0, 1, 1], [], []>} : vector<8x2048xbf16>, vector<2048x128xbf16>, vector<8x128xf32> -> vector<8x128xf32>
    %15 = tpu.iota {dimensions = array<i32: 1>} : vector<8x128xi32>
    %c6_i32 = arith.constant 6 : i32
    %16 = vector.broadcast %c6_i32 : i32 to vector<8x128xi32>
    %17 = arith.cmpi slt, %15, %16 : vector<8x128xi32>
    %18 = arith.select %17, %12, %14 : vector<8x128xi1>, vector<8x128xf32>
    %c0_10 = arith.constant 0 : index
    %c0_11 = arith.constant 0 : index
    %19 = vector.load %arg4[%c0_10, %c0_11] : memref<1x128xf32, #tpu.memory_space<vmem>>, vector<1x128xf32>
    %20 = vector.broadcast %19 : vector<1x128xf32> to vector<8x128xf32>
    %21 = arith.addf %18, %20 : vector<8x128xf32>
    %c0_12 = arith.constant 0 : index
    %c0_13 = arith.constant 0 : index
    %22 = vector.load %arg5[%c0_12, %c0_13] : memref<8x128xf32, #tpu.memory_space<vmem>>, vector<8x128xf32>
    tpu.vector_store %arg5[%c0_12, %c0_13], %21 {strides = array<i32>} : memref<8x128xf32, #tpu.memory_space<vmem>>, vector<8x128xf32>,
    %c6_i32_14 = arith.constant 6 : i32
    %23 = vector.broadcast %c6_i32_14 : i32 to vector<8x128xi32>
    %24 = arith.cmpi sge, %15, %23 : vector<8x128xi32>
    %c12_i32 = arith.constant 12 : i32
    %25 = vector.broadcast %c12_i32 : i32 to vector<8x128xi32>
    %26 = arith.cmpi slt, %15, %25 : vector<8x128xi32>
    %27 = arith.andi %24, %26 : vector<8x128xi1>
    %cst_15 = arith.constant -1.000000e+30 : f32
    %28 = vector.broadcast %cst_15 : f32 to vector<8x128xf32>
    %29 = arith.select %27, %21, %28 : vector<8x128xi1>, vector<8x128xf32>
    %cst_16 = arith.constant dense<0xFF800000> : vector<8xf32>
    %30 = vector.multi_reduction <maximumf>, %29, %cst_16 [1] : vector<8x128xf32> to vector<8xf32>
    %31 = vector.shape_cast %30 : vector<8xf32> to vector<8x1xf32>
    %32 = vector.broadcast %31 : vector<8x1xf32> to vector<8x128xf32>
    %33 = arith.subf %29, %32 : vector<8x128xf32>
    %34 = math.exp %33 : vector<8x128xf32>
    %cst_17 = arith.constant dense<0.000000e+00> : vector<8xf32>
    %35 = vector.multi_reduction <add>, %34, %cst_17 [1] : vector<8x128xf32> to vector<8xf32>
    %36 = vector.shape_cast %35 : vector<8xf32> to vector<8x1xf32>
    %37 = math.log %36 : vector<8x1xf32>
    %38 = vector.broadcast %31 : vector<8x1xf32> to vector<8x128xf32>
    %39 = arith.subf %21, %38 : vector<8x128xf32>
    %40 = vector.broadcast %37 : vector<8x1xf32> to vector<8x128xf32>
    %41 = arith.subf %39, %40 : vector<8x128xf32>
    %c0_18 = arith.constant 0 : index
    %c0_19 = arith.constant 0 : index
    %42 = vector.load %arg6[%c0_18, %c0_19] : memref<8x128xf32, #tpu.memory_space<vmem>>, vector<8x128xf32>
    tpu.vector_store %arg6[%c0_18, %c0_19], %41 {strides = array<i32>} : memref<8x128xf32, #tpu.memory_space<vmem>>, vector<8x128xf32>,
    return
  }
}

</mosaic_0001>

<llo_original>
// kernel: pen_q_forward.1
$region0: #{pen_q_forward.1}
  #allocation0 [shape = 'u32[]', space=smem, size = 0x4, offset = 0x4, fixed_abs, tag = 'smem constant byte address 0x4 - core index']
  #allocation1 [shape = 'u32[72,128]{1,0:T(1,128)}', space=vmem, size = 0x9000, scoped, tag = 'internal scratch']
  %s0 = inlined_call_operand.vmem [shape: f32[8,48], index: 0, kind: input, shape index: {}]
  %s1 = inlined_call_operand.hbm [shape: bf16[48,4096], index: 1, kind: input, shape index: {}]
  %s2 = inlined_call_operand.vmem [shape: f32[1,4096], index: 2, kind: input, shape index: {}]
  %s3 = inlined_call_operand.hbm [shape: bf16[2048,128], index: 3, kind: input, shape index: {}]
  %s4 = inlined_call_operand.vmem [shape: f32[1,128], index: 4, kind: input, shape index: {}]
  %s5 = inlined_call_operand.vmem [shape: f32[8,128], index: 5, kind: output, shape index: {0}]
  %s6 = inlined_call_operand.vmem [shape: f32[8,128], index: 6, kind: output, shape index: {1}]
  %7 = xla_tuple %s5, %s6
  %s8 = sld [smem:[#allocation0]]
  $region46: #{pen_q_forward.1} parent=0
    _
  %s10 = ssub.s32 1, %s8
  %s11 = scalar_select 0, %s10, %s8
  $region1: #{pen_q_forward.1} parent=0
    #allocation2 [shape = 'u8[393216]{0}', space=vmem, size = 0x60000, scoped, tag = 'input window, operand 1, single buffered']
    #allocation3 [shape = 's32[1]{0}', space=sflag, size = 0x4, scoped, tag = 'scoped memory for pen_q_forward.1']
    #allocation4 [shape = 'u8[524288]{0}', space=vmem, size = 0x80000, scoped, tag = 'input window, operand 3, single buffered']
    #allocation5 [shape = 's32[1]{0}', space=sflag, size = 0x4, scoped, tag = 'scoped memory for pen_q_forward.1']
    %12 = vsyncpa [#allocation3], 0
    %13 = vsyncpa [#allocation5], 0
    // Predicated region
    $region2: #{pen_q_forward.1} parent=1 // pred_check
      _
    $region3: #{pen_q_forward.1} parent=1 // pred_check_branch
      %15 = sbr.rel (0) target = $region5
    $region4: #{pen_q_forward.1} parent=1 // pred_region
      _
    $region5: #{pen_q_forward.1} parent=1 // pred_fallthru
      _
    // Predicated region
    $region6: #{pen_q_forward.1} parent=1 // pred_check
      _
    $region7: #{pen_q_forward.1} parent=1 // pred_check_branch
      %17 = sbr.rel (0) target = $region9
    $region8: #{pen_q_forward.1} parent=1 // pred_region
      %19 = vsyncadd [#allocation3], 0
      %s20 = sshll.u32 %s1, 4
      %s21 = int_to_ptr.hbm [resolvable:$true] %s20
      %s22 = sshll.u32 [#allocation2], 4
      %s23 = int_to_ptr.vmem [resolvable:$true] %s22
      %28 = dma.hbm_to_vmem [thread:$0]  %s21, 12288, %s23, [#allocation3], 2048, 2048, 128
    $region9: #{pen_q_forward.1} parent=1 // pred_fallthru
      _
    // Predicated region
    $region10: #{pen_q_forward.1} parent=1 // pred_check
      _
    $region11: #{pen_q_forward.1} parent=1 // pred_check_branch
      %30 = sbr.rel (0) target = $region13
    $region12: #{pen_q_forward.1} parent=1 // pred_region
      _
    $region13: #{pen_q_forward.1} parent=1 // pred_fallthru
      _
    // Predicated region
    $region14: #{pen_q_forward.1} parent=1 // pred_check
      _
    $region15: #{pen_q_forward.1} parent=1 // pred_check_branch
      %32 = sbr.rel (0) target = $region17
    $region16: #{pen_q_forward.1} parent=1 // pred_region
      %34 = vsyncadd [#allocation5], 0
      %s35 = sshll.u32 %s3, 4
      %s36 = int_to_ptr.hbm [resolvable:$true] %s35
      %s37 = sshll.u32 [#allocation4], 4
      %s38 = int_to_ptr.vmem [resolvable:$true] %s37
      %43 = dma.hbm_to_vmem [thread:$0]  %s36, 16384, %s38, [#allocation5], 64, 64, 4
    $region17: #{pen_q_forward.1} parent=1 // pred_fallthru
      _
    // Predicated region
    $region18: #{pen_q_forward.1} parent=1 // pred_check
      _
    $region19: #{pen_q_forward.1} parent=1 // pred_check_branch
      %45 = sbr.rel (0) target = $region21
    $region20: #{pen_q_forward.1} parent=1 // pred_region
      _
    $region21: #{pen_q_forward.1} parent=1 // pred_fallthru
      _
    // Predicated region
    $region22: #{pen_q_forward.1} parent=1 // pred_check
      _
    $region23: #{pen_q_forward.1} parent=1 // pred_check_branch
      %47 = sbr.rel (0) target = $region25
    $region24: #{pen_q_forward.1} parent=1 // pred_region
      %49 = dma.done [#allocation3], 12288
    $region25: #{pen_q_forward.1} parent=1 // pred_fallthru
      _
    // Predicated region
    $region26: #{pen_q_forward.1} parent=1 // pred_check
      _
    $region27: #{pen_q_forward.1} parent=1 // pred_check_branch
      %51 = sbr.rel (0) target = $region29
    $region28: #{pen_q_forward.1} parent=1 // pred_region
      %53 = dma.done [#allocation5], 16384
    $region29: #{pen_q_forward.1} parent=1 // pred_fallthru
      _
    %v55 = vld [vmem:[%s0] sm:$0xff]
    %v56 = vpack.c.bf16 %v55, %v55
    %v57 = vld [vmem:[#allocation2] sm:$0xff]
    %v58 = vld [vmem:[#allocation2 + $0x8] sm:$0xff]
    %v59 = vld [vmem:[#allocation2 + $0x10] sm:$0xff]
    %v60 = vld [vmem:[#allocation2 + $0x18] sm:$0xff]
    %v61 = vld [vmem:[#allocation2 + $0x20] sm:$0xff]
    %v62 = vld [vmem:[#allocation2 + $0x28] sm:$0xff]
    %v63 = vld [vmem:[#allocation2 + $0x30] sm:$0xff]
    %v64 = vld [vmem:[#allocation2 + $0x38] sm:$0xff]
    %v65 = vld [vmem:[#allocation2 + $0x40] sm:$0xff]
    %v66 = vld [vmem:[#allocation2 + $0x48] sm:$0xff]
    %v67 = vld [vmem:[#allocation2 + $0x50] sm:$0xff]
    %v68 = vld [vmem:[#allocation2 + $0x58] sm:$0xff]
    %v69 = vld [vmem:[#allocation2 + $0x60] sm:$0xff]
    %v70 = vld [vmem:[#allocation2 + $0x68] sm:$0xff]
    %v71 = vld [vmem:[#allocation2 + $0x70] sm:$0xff]
    %v72 = vld [vmem:[#allocation2 + $0x78] sm:$0xff]
    %v73 = vld [vmem:[#allocation2 + $0x80] sm:$0xff]
    %v74 = vld [vmem:[#allocation2 + $0x88] sm:$0xff]
    %v75 = vld [vmem:[#allocation2 + $0x90] sm:$0xff]
    %v76 = vld [vmem:[#allocation2 + $0x98] sm:$0xff]
    %v77 = vld [vmem:[#allocation2 + $0xa0] sm:$0xff]
    %v78 = vld [vmem:[#allocation2 + $0xa8] sm:$0xff]
    %v79 = vld [vmem:[#allocation2 + $0xb0] sm:$0xff]
    %v80 = vld [vmem:[#allocation2 + $0xb8] sm:$0xff]
    %v81 = vld [vmem:[#allocation2 + $0xc0] sm:$0xff]
    %v82 = vld [vmem:[#allocation2 + $0xc8] sm:$0xff]
    %v83 = vld [vmem:[#allocation2 + $0xd0] sm:$0xff]
    %v84 = vld [vmem:[#allocation2 + $0xd8] sm:$0xff]
    %v85 = vld [vmem:[#allocation2 + $0xe0] sm:$0xff]
    %v86 = vld [vmem:[#allocation2 + $0xe8] sm:$0xff]
    %v87 = vld [vmem:[#allocation2 + $0xf0] sm:$0xff]
    %v88 = vld [vmem:[#allocation2 + $0xf8] sm:$0xff]
    %v89 = vld [vmem:[#allocation2 + $0x100] sm:$0xff]
    %v90 = vld [vmem:[#allocation2 + $0x108] sm:$0xff]
    %v91 = vld [vmem:[#allocation2 + $0x110] sm:$0xff]
    %v92 = vld [vmem:[#allocation2 + $0x118] sm:$0xff]
    %v93 = vld [vmem:[#allocation2 + $0x120] sm:$0xff]
    %v94 = vld [vmem:[#allocation2 + $0x128] sm:$0xff]
    %v95 = vld [vmem:[#allocation2 + $0x130] sm:$0xff]
    %v96 = vld [vmem:[#allocation2 + $0x138] sm:$0xff]
    %v97 = vld [vmem:[#allocation2 + $0x140] sm:$0xff]
    %v98 = vld [vmem:[#allocation2 + $0x148] sm:$0xff]
    %v99 = vld [vmem:[#allocation2 + $0x150] sm:$0xff]
    %v100 = vld [vmem:[#allocation2 + $0x158] sm:$0xff]
    %v101 = vld [vmem:[#allocation2 + $0x160] sm:$0xff]
    %v102 = vld [vmem:[#allocation2 + $0x168] sm:$0xff]
    %v103 = vld [vmem:[#allocation2 + $0x170] sm:$0xff]
    %v104 = vld [vmem:[#allocation2 + $0x178] sm:$0xff]
    %v105 = vld [vmem:[#allocation2 + $0x180] sm:$0xff]
    %v106 = vld [vmem:[#allocation2 + $0x188] sm:$0xff]
    %v107 = vld [vmem:[#allocation2 + $0x190] sm:$0xff]
    %v108 = vld [vmem:[#allocation2 + $0x198] sm:$0xff]
    %v109 = vld [vmem:[#allocation2 + $0x1a0] sm:$0xff]
    %v110 = vld [vmem:[#allocation2 + $0x1a8] sm:$0xff]
    %v111 = vld [vmem:[#allocation2 + $0x1b0] sm:$0xff]
    %v112 = vld [vmem:[#allocation2 + $0x1b8] sm:$0xff]
    %v113 = vld [vmem:[#allocation2 + $0x1c0] sm:$0xff]
    %v114 = vld [vmem:[#allocation2 + $0x1c8] sm:$0xff]
    %v115 = vld [vmem:[#allocation2 + $0x1d0] sm:$0xff]
    %v116 = vld [vmem:[#allocation2 + $0x1d8] sm:$0xff]
    %v117 = vld [vmem:[#allocation2 + $0x1e0] sm:$0xff]
    %v118 = vld [vmem:[#allocation2 + $0x1e8] sm:$0xff]
    %v119 = vld [vmem:[#allocation2 + $0x1f0] sm:$0xff]
    %v120 = vld [vmem:[#allocation2 + $0x1f8] sm:$0xff]
    %v121 = vld [vmem:[#allocation2 + $0x200] sm:$0xff]
    %v122 = vld [vmem:[#allocation2 + $0x208] sm:$0xff]
    %v123 = vld [vmem:[#allocation2 + $0x210] sm:$0xff]
    %v124 = vld [vmem:[#allocation2 + $0x218] sm:$0xff]
    %v125 = vld [vmem:[#allocation2 + $0x220] sm:$0xff]
    %v126 = vld [vmem:[#allocation2 + $0x228] sm:$0xff]
    %v127 = vld [vmem:[#allocation2 + $0x230] sm:$0xff]
    %v128 = vld [vmem:[#allocation2 + $0x238] sm:$0xff]
    %v129 = vld [vmem:[#allocation2 + $0x240] sm:$0xff]
    %v130 = vld [vmem:[#allocation2 + $0x248] sm:$0xff]
    %v131 = vld [vmem:[#allocation2 + $0x250] sm:$0xff]
    %v132 = vld [vmem:[#allocation2 + $0x258] sm:$0xff]
    %v133 = vld [vmem:[#allocation2 + $0x260] sm:$0xff]
    %v134 = vld [vmem:[#allocation2 + $0x268] sm:$0xff]
    %v135 = vld [vmem:[#allocation2 + $0x270] sm:$0xff]
    %v136 = vld [vmem:[#allocation2 + $0x278] sm:$0xff]
    %v137 = vld [vmem:[#allocation2 + $0x280] sm:$0xff]
    %v138 = vld [vmem:[#allocation2 + $0x288] sm:$0xff]
    %v139 = vld [vmem:[#allocation2 + $0x290] sm:$0xff]
    %v140 = vld [vmem:[#allocation2 + $0x298] sm:$0xff]
    %v141 = vld [vmem:[#allocation2 + $0x2a0] sm:$0xff]
    %v142 = vld [vmem:[#allocation2 + $0x2a8] sm:$0xff]
    %v143 = vld [vmem:[#allocation2 + $0x2b0] sm:$0xff]
    %v144 = vld [vmem:[#allocation2 + $0x2b8] sm:$0xff]
    %v145 = vld [vmem:[#allocation2 + $0x2c0] sm:$0xff]
    %v146 = vld [vmem:[#allocation2 + $0x2c8] sm:$0xff]
    %v147 = vld [vmem:[#allocation2 + $0x2d0] sm:$0xff]
    %v148 = vld [vmem:[#allocation2 + $0x2d8] sm:$0xff]
    %v149 = vld [vmem:[#allocation2 + $0x2e0] sm:$0xff]
    %v150 = vld [vmem:[#allocation2 + $0x2e8] sm:$0xff]
    %v151 = vld [vmem:[#allocation2 + $0x2f0] sm:$0xff]
    %v152 = vld [vmem:[#allocation2 + $0x2f8] sm:$0xff]
    %v153 = vld [vmem:[%s2] sm:$0xff]
    %v154 = vld [vmem:[%s2 + $0x8] sm:$0xff]
    %v155 = vld [vmem:[%s2 + $0x10] sm:$0xff]
    %v156 = vld [vmem:[%s2 + $0x18] sm:$0xff]
    %v161 = vperm.slane %v153, 0
    %v162 = vperm.slane %v153, 1
    %v163 = vperm.slane %v153, 2
    %v164 = vperm.slane %v153, 3
    %v165 = vperm.slane %v153, 4
    %v166 = vperm.slane %v153, 5
    %v167 = vperm.slane %v153, 6
    %v168 = vperm.slane %v153, 7
    %v169 = vperm.slane %v154, 0
    %v170 = vperm.slane %v154, 1
    %v171 = vperm.slane %v154, 2
    %v172 = vperm.slane %v154, 3
    %v173 = vperm.slane %v154, 4
    %v174 = vperm.slane %v154, 5
    %v175 = vperm.slane %v154, 6
    %v176 = vperm.slane %v154, 7
    %v177 = vperm.slane %v155, 0
    %v178 = vperm.slane %v155, 1
    %v179 = vperm.slane %v155, 2
    %v180 = vperm.slane %v155, 3
    %v181 = vperm.slane %v155, 4
    %v182 = vperm.slane %v155, 5
    %v183 = vperm.slane %v155, 6
    %v184 = vperm.slane %v155, 7
    %v185 = vperm.slane %v156, 0
    %v186 = vperm.slane %v156, 1
    %v187 = vperm.slane %v156, 2
    %v188 = vperm.slane %v156, 3
    %v189 = vperm.slane %v156, 4
    %v190 = vperm.slane %v156, 5
    %v191 = vperm.slane %v156, 6
    %v192 = vperm.slane %v156, 7
    %v321 = vunpack.c.l.b16 %v57
    %v322 = vunpack.c.h.b16 %v57
    %v323 = vunpack.c.l.b16 %v58
    %v324 = vunpack.c.h.b16 %v58
    %v325 = vunpack.c.l.b16 %v59
    %v326 = vunpack.c.h.b16 %v59
    %v327 = vunpack.c.l.b16 %v60
    %v328 = vunpack.c.h.b16 %v60
    %v329 = vunpack.c.l.b16 %v61
    %v330 = vunpack.c.h.b16 %v61
    %v331 = vunpack.c.l.b16 %v62
    %v332 = vunpack.c.h.b16 %v62
    %v333 = vunpack.c.l.b16 %v63
    %v334 = vunpack.c.h.b16 %v63
    %v335 = vunpack.c.l.b16 %v64
    %v336 = vunpack.c.h.b16 %v64
    %v337 = vunpack.c.l.b16 %v65
    %v338 = vunpack.c.h.b16 %v65
    %v339 = vunpack.c.l.b16 %v66
    %v340 = vunpack.c.h.b16 %v66
    %v341 = vunpack.c.l.b16 %v67
    %v342 = vunpack.c.h.b16 %v67
    %v343 = vunpack.c.l.b16 %v68
    %v344 = vunpack.c.h.b16 %v68
    %v345 = vunpack.c.l.b16 %v69
    %v346 = vunpack.c.h.b16 %v69
    %v347 = vunpack.c.l.b16 %v70
    %v348 = vunpack.c.h.b16 %v70
    %v349 = vunpack.c.l.b16 %v71
    %v350 = vunpack.c.h.b16 %v71
    %v351 = vunpack.c.l.b16 %v72
    %v352 = vunpack.c.h.b16 %v72
    %v353 = vunpack.c.l.b16 %v73
    %v354 = vunpack.c.h.b16 %v73
    %v355 = vunpack.c.l.b16 %v74
    %v356 = vunpack.c.h.b16 %v74
    %v357 = vunpack.c.l.b16 %v75
    %v358 = vunpack.c.h.b16 %v75
    %v359 = vunpack.c.l.b16 %v76
    %v360 = vunpack.c.h.b16 %v76
    %v361 = vunpack.c.l.b16 %v77
    %v362 = vunpack.c.h.b16 %v77
    %v363 = vunpack.c.l.b16 %v78
    %v364 = vunpack.c.h.b16 %v78
    %v365 = vunpack.c.l.b16 %v79
    %v366 = vunpack.c.h.b16 %v79
    %v367 = vunpack.c.l.b16 %v80
    %v368 = vunpack.c.h.b16 %v80
    %v369 = vunpack.c.l.b16 %v81
    %v370 = vunpack.c.h.b16 %v81
    %v371 = vunpack.c.l.b16 %v82
    %v372 = vunpack.c.h.b16 %v82
    %v373 = vunpack.c.l.b16 %v83
    %v374 = vunpack.c.h.b16 %v83
    %v375 = vunpack.c.l.b16 %v84
    %v376 = vunpack.c.h.b16 %v84
    %v377 = vunpack.c.l.b16 %v85
    %v378 = vunpack.c.h.b16 %v85
    %v379 = vunpack.c.l.b16 %v86
    %v380 = vunpack.c.h.b16 %v86
    %v381 = vunpack.c.l.b16 %v87
    %v382 = vunpack.c.h.b16 %v87
    %v383 = vunpack.c.l.b16 %v88
    %v384 = vunpack.c.h.b16 %v88
    %v385 = vunpack.c.l.b16 %v89
    %v386 = vunpack.c.h.b16 %v89
    %v387 = vunpack.c.l.b16 %v90
    %v388 = vunpack.c.h.b16 %v90
    %v389 = vunpack.c.l.b16 %v91
    %v390 = vunpack.c.h.b16 %v91
    %v391 = vunpack.c.l.b16 %v92
    %v392 = vunpack.c.h.b16 %v92
    %v393 = vunpack.c.l.b16 %v93
    %v394 = vunpack.c.h.b16 %v93
    %v395 = vunpack.c.l.b16 %v94
    %v396 = vunpack.c.h.b16 %v94
    %v397 = vunpack.c.l.b16 %v95
    %v398 = vunpack.c.h.b16 %v95
    %v399 = vunpack.c.l.b16 %v96
    %v400 = vunpack.c.h.b16 %v96
    %v401 = vunpack.c.l.b16 %v97
    %v402 = vunpack.c.h.b16 %v97
    %v403 = vunpack.c.l.b16 %v98
    %v404 = vunpack.c.h.b16 %v98
    %v405 = vunpack.c.l.b16 %v99
    %v406 = vunpack.c.h.b16 %v99
    %v407 = vunpack.c.l.b16 %v100
    %v408 = vunpack.c.h.b16 %v100
    %v409 = vunpack.c.l.b16 %v101
    %v410 = vunpack.c.h.b16 %v101
    %v411 = vunpack.c.l.b16 %v102
    %v412 = vunpack.c.h.b16 %v102
    %v413 = vunpack.c.l.b16 %v103
    %v414 = vunpack.c.h.b16 %v103
    %v415 = vunpack.c.l.b16 %v104
    %v416 = vunpack.c.h.b16 %v104
    %v417 = vunpack.c.l.b16 %v105
    %v418 = vunpack.c.h.b16 %v105
    %v419 = vunpack.c.l.b16 %v106
    %v420 = vunpack.c.h.b16 %v106
    %v421 = vunpack.c.l.b16 %v107
    %v422 = vunpack.c.h.b16 %v107
    %v423 = vunpack.c.l.b16 %v108
    %v424 = vunpack.c.h.b16 %v108
    %v425 = vunpack.c.l.b16 %v109
    %v426 = vunpack.c.h.b16 %v109
    %v427 = vunpack.c.l.b16 %v110
    %v428 = vunpack.c.h.b16 %v110
    %v429 = vunpack.c.l.b16 %v111
    %v430 = vunpack.c.h.b16 %v111
    %v431 = vunpack.c.l.b16 %v112
    %v432 = vunpack.c.h.b16 %v112
    %v433 = vunpack.c.l.b16 %v113
    %v434 = vunpack.c.h.b16 %v113
    %v435 = vunpack.c.l.b16 %v114
    %v436 = vunpack.c.h.b16 %v114
    %v437 = vunpack.c.l.b16 %v115
    %v438 = vunpack.c.h.b16 %v115
    %v439 = vunpack.c.l.b16 %v116
    %v440 = vunpack.c.h.b16 %v116
    %v441 = vunpack.c.l.b16 %v117
    %v442 = vunpack.c.h.b16 %v117
    %v443 = vunpack.c.l.b16 %v118
    %v444 = vunpack.c.h.b16 %v118
    %v445 = vunpack.c.l.b16 %v119
    %v446 = vunpack.c.h.b16 %v119
    %v447 = vunpack.c.l.b16 %v120
    %v448 = vunpack.c.h.b16 %v120
    %v449 = vunpack.c.l.b16 %v121
    %v450 = vunpack.c.h.b16 %v121
    %v451 = vunpack.c.l.b16 %v122
    %v452 = vunpack.c.h.b16 %v122
    %v453 = vunpack.c.l.b16 %v123
    %v454 = vunpack.c.h.b16 %v123
    %v455 = vunpack.c.l.b16 %v124
    %v456 = vunpack.c.h.b16 %v124
    %v457 = vunpack.c.l.b16 %v125
    %v458 = vunpack.c.h.b16 %v125
    %v459 = vunpack.c.l.b16 %v126
    %v460 = vunpack.c.h.b16 %v126
    %v461 = vunpack.c.l.b16 %v127
    %v462 = vunpack.c.h.b16 %v127
    %v463 = vunpack.c.l.b16 %v128
    %v464 = vunpack.c.h.b16 %v128
    %v465 = vunpack.c.l.b16 %v129
    %v466 = vunpack.c.h.b16 %v129
    %v467 = vunpack.c.l.b16 %v130
    %v468 = vunpack.c.h.b16 %v130
    %v469 = vunpack.c.l.b16 %v131
    %v470 = vunpack.c.h.b16 %v131
    %v471 = vunpack.c.l.b16 %v132
    %v472 = vunpack.c.h.b16 %v132
    %v473 = vunpack.c.l.b16 %v133
    %v474 = vunpack.c.h.b16 %v133
    %v475 = vunpack.c.l.b16 %v134
    %v476 = vunpack.c.h.b16 %v134
    %v477 = vunpack.c.l.b16 %v135
    %v478 = vunpack.c.h.b16 %v135
    %v479 = vunpack.c.l.b16 %v136
    %v480 = vunpack.c.h.b16 %v136
    %v481 = vunpack.c.l.b16 %v137
    %v482 = vunpack.c.h.b16 %v137
    %v483 = vunpack.c.l.b16 %v138
    %v484 = vunpack.c.h.b16 %v138
    %v485 = vunpack.c.l.b16 %v139
    %v486 = vunpack.c.h.b16 %v139
    %v487 = vunpack.c.l.b16 %v140
    %v488 = vunpack.c.h.b16 %v140
    %v489 = vunpack.c.l.b16 %v141
    %v490 = vunpack.c.h.b16 %v141
    %v491 = vunpack.c.l.b16 %v142
    %v492 = vunpack.c.h.b16 %v142
    %v493 = vunpack.c.l.b16 %v143
    %v494 = vunpack.c.h.b16 %v143
    %v495 = vunpack.c.l.b16 %v144
    %v496 = vunpack.c.h.b16 %v144
    %v497 = vunpack.c.l.b16 %v145
    %v498 = vunpack.c.h.b16 %v145
    %v499 = vunpack.c.l.b16 %v146
    %v500 = vunpack.c.h.b16 %v146
    %v501 = vunpack.c.l.b16 %v147
    %v502 = vunpack.c.h.b16 %v147
    %v503 = vunpack.c.l.b16 %v148
    %v504 = vunpack.c.h.b16 %v148
    %v505 = vunpack.c.l.b16 %v149
    %v506 = vunpack.c.h.b16 %v149
    %v507 = vunpack.c.l.b16 %v150
    %v508 = vunpack.c.h.b16 %v150
    %v509 = vunpack.c.l.b16 %v151
    %v510 = vunpack.c.h.b16 %v151
    %v511 = vunpack.c.l.b16 %v152
    %v512 = vunpack.c.h.b16 %v152
    %v513 = vpack.c.b16 %v353, %v321
    %v514 = vpack.c.b16 %v354, %v322
    %v515 = vpack.c.b16 %v355, %v323
    %v516 = vpack.c.b16 %v356, %v324
    %v517 = vpack.c.b16 %v357, %v325
    %v518 = vpack.c.b16 %v358, %v326
    %v519 = vpack.c.b16 %v359, %v327
    %v520 = vpack.c.b16 %v360, %v328
    %v521 = vpack.c.b16 %v361, %v329
    %v522 = vpack.c.b16 %v362, %v330
    %v523 = vpack.c.b16 %v363, %v331
    %v524 = vpack.c.b16 %v364, %v332
    %v525 = vpack.c.b16 %v365, %v333
    %v526 = vpack.c.b16 %v366, %v334
    %v527 = vpack.c.b16 %v367, %v335
    %v528 = vpack.c.b16 %v368, %v336
    %v529 = vpack.c.b16 %v369, %v337
    %v530 = vpack.c.b16 %v370, %v338
    %v531 = vpack.c.b16 %v371, %v339
    %v532 = vpack.c.b16 %v372, %v340
    %v533 = vpack.c.b16 %v373, %v341
    %v534 = vpack.c.b16 %v374, %v342
    %v535 = vpack.c.b16 %v375, %v343
    %v536 = vpack.c.b16 %v376, %v344
    %v537 = vpack.c.b16 %v377, %v345
    %v538 = vpack.c.b16 %v378, %v346
    %v539 = vpack.c.b16 %v379, %v347
    %v540 = vpack.c.b16 %v380, %v348
    %v541 = vpack.c.b16 %v381, %v349
    %v542 = vpack.c.b16 %v382, %v350
    %v543 = vpack.c.b16 %v383, %v351
    %v544 = vpack.c.b16 %v384, %v352
    %v545 = vpack.c.b16 %v417, %v385
    %v546 = vpack.c.b16 %v418, %v386
    %v547 = vpack.c.b16 %v419, %v387
    %v548 = vpack.c.b16 %v420, %v388
    %v549 = vpack.c.b16 %v421, %v389
    %v550 = vpack.c.b16 %v422, %v390
    %v551 = vpack.c.b16 %v423, %v391
    %v552 = vpack.c.b16 %v424, %v392
    %v553 = vpack.c.b16 %v425, %v393
    %v554 = vpack.c.b16 %v426, %v394
    %v555 = vpack.c.b16 %v427, %v395
    %v556 = vpack.c.b16 %v428, %v396
    %v557 = vpack.c.b16 %v429, %v397
    %v558 = vpack.c.b16 %v430, %v398
    %v559 = vpack.c.b16 %v431, %v399
    %v560 = vpack.c.b16 %v432, %v400
    %v561 = vpack.c.b16 %v433, %v401
    %v562 = vpack.c.b16 %v434, %v402
    %v563 = vpack.c.b16 %v435, %v403
    %v564 = vpack.c.b16 %v436, %v404
    %v565 = vpack.c.b16 %v437, %v405
    %v566 = vpack.c.b16 %v438, %v406
    %v567 = vpack.c.b16 %v439, %v407
    %v568 = vpack.c.b16 %v440, %v408
    %v569 = vpack.c.b16 %v441, %v409
    %v570 = vpack.c.b16 %v442, %v410
    %v571 = vpack.c.b16 %v443, %v411
    %v572 = vpack.c.b16 %v444, %v412
    %v573 = vpack.c.b16 %v445, %v413
    %v574 = vpack.c.b16 %v446, %v414
    %v575 = vpack.c.b16 %v447, %v415
    %v576 = vpack.c.b16 %v448, %v416
    %v577 = vpack.c.b16 %v481, %v449
    %v578 = vpack.c.b16 %v482, %v450
    %v579 = vpack.c.b16 %v483, %v451
    %v580 = vpack.c.b16 %v484, %v452
    %v581 = vpack.c.b16 %v485, %v453
    %v582 = vpack.c.b16 %v486, %v454
    %v583 = vpack.c.b16 %v487, %v455
    %v584 = vpack.c.b16 %v488, %v456
    %v585 = vpack.c.b16 %v489, %v457
    %v586 = vpack.c.b16 %v490, %v458
    %v587 = vpack.c.b16 %v491, %v459
    %v588 = vpack.c.b16 %v492, %v460
    %v589 = vpack.c.b16 %v493, %v461
    %v590 = vpack.c.b16 %v494, %v462
    %v591 = vpack.c.b16 %v495, %v463
    %v592 = vpack.c.b16 %v496, %v464
    %v593 = vpack.c.b16 %v497, %v465
    %v594 = vpack.c.b16 %v498, %v466
    %v595 = vpack.c.b16 %v499, %v467
    %v596 = vpack.c.b16 %v500, %v468
    %v597 = vpack.c.b16 %v501, %v469
    %v598 = vpack.c.b16 %v502, %v470
    %v599 = vpack.c.b16 %v503, %v471
    %v600 = vpack.c.b16 %v504, %v472
    %v601 = vpack.c.b16 %v505, %v473
    %v602 = vpack.c.b16 %v506, %v474
    %v603 = vpack.c.b16 %v507, %v475
    %v604 = vpack.c.b16 %v508, %v476
    %v605 = vpack.c.b16 %v509, %v477
    %v606 = vpack.c.b16 %v510, %v478
    %v607 = vpack.c.b16 %v511, %v479
    %v608 = vpack.c.b16 %v512, %v480
    %vm705 = vcmask 392192
    %v707 = vsel %vm705, %v56, 0
    %709 = vmatpush.bf16.msra.mxu0 0
    %710 = vmatpush.bf16.msra.mxu0 0
    %711 = vmatpush.bf16.msra.mxu0 0
    %712 = vmatpush.bf16.msra.mxu0 0
    %713 = vmatpush.bf16.msra.mxu0 0
    %714 = vmatpush.bf16.msra.mxu0 %v577
    %715 = vmatpush.bf16.msra.mxu0 %v545
    %716 = vmatpush.bf16.msra.mxu0 %v513
    %717 = vmatmul.bf16.gmra.mxu0 %v707
    %v718 = vpop.f32.mrf.mxu0
    %v719 = vadd.f32 %v161, %v718
    %v720 = vpop.f32.mrf.mxu0
    %721 = vdwg.mxu0
    %722 = vmatpush.bf16.msra.mxu0 0
    %723 = vmatpush.bf16.msra.mxu0 0
    %724 = vmatpush.bf16.msra.mxu0 0
    %725 = vmatpush.bf16.msra.mxu0 0
    %726 = vmatpush.bf16.msra.mxu0 0
    %727 = vmatpush.bf16.msra.mxu0 %v578
    %728 = vmatpush.bf16.msra.mxu0 %v546
    %729 = vmatpush.bf16.msra.mxu0 %v514
    %730 = vmatmul.bf16.gmra.mxu0 %v707
    %v731 = vpop.f32.mrf.mxu0
    %v732 = vadd.f32 %v162, %v731
    %v733 = vpop.f32.mrf.mxu0
    %734 = vdwg.mxu0
    %735 = vmatpush.bf16.msra.mxu0 0
    %736 = vmatpush.bf16.msra.mxu0 0
    %737 = vmatpush.bf16.msra.mxu0 0
    %738 = vmatpush.bf16.msra.mxu0 0
    %739 = vmatpush.bf16.msra.mxu0 0
    %740 = vmatpush.bf16.msra.mxu0 %v579
    %741 = vmatpush.bf16.msra.mxu0 %v547
    %742 = vmatpush.bf16.msra.mxu0 %v515
    %743 = vmatmul.bf16.gmra.mxu0 %v707
    %v744 = vpop.f32.mrf.mxu0
    %v745 = vadd.f32 %v163, %v744
    %v746 = vpop.f32.mrf.mxu0
    %747 = vdwg.mxu0
    %748 = vmatpush.bf16.msra.mxu0 0
    %749 = vmatpush.bf16.msra.mxu0 0
    %750 = vmatpush.bf16.msra.mxu0 0
    %751 = vmatpush.bf16.msra.mxu0 0
    %752 = vmatpush.bf16.msra.mxu0 0
    %753 = vmatpush.bf16.msra.mxu0 %v580
    %754 = vmatpush.bf16.msra.mxu0 %v548
    %755 = vmatpush.bf16.msra.mxu0 %v516
    %756 = vmatmul.bf16.gmra.mxu0 %v707
    %v757 = vpop.f32.mrf.mxu0
    %v758 = vadd.f32 %v164, %v757
    %v759 = vpop.f32.mrf.mxu0
    %760 = vdwg.mxu0
    %761 = vmatpush.bf16.msra.mxu0 0
    %762 = vmatpush.bf16.msra.mxu0 0
    %763 = vmatpush.bf16.msra.mxu0 0
    %764 = vmatpush.bf16.msra.mxu0 0
    %765 = vmatpush.bf16.msra.mxu0 0
    %766 = vmatpush.bf16.msra.mxu0 %v581
    %767 = vmatpush.bf16.msra.mxu0 %v549
    %768 = vmatpush.bf16.msra.mxu0 %v517
    %769 = vmatmul.bf16.gmra.mxu0 %v707
    %v770 = vpop.f32.mrf.mxu0
    %v771 = vadd.f32 %v165, %v770
    %v772 = vpop.f32.mrf.mxu0
    %773 = vdwg.mxu0
    %774 = vmatpush.bf16.msra.mxu0 0
    %775 = vmatpush.bf16.msra.mxu0 0
    %776 = vmatpush.bf16.msra.mxu0 0
    %777 = vmatpush.bf16.msra.mxu0 0
    %778 = vmatpush.bf16.msra.mxu0 0
    %779 = vmatpush.bf16.msra.mxu0 %v582
    %780 = vmatpush.bf16.msra.mxu0 %v550
    %781 = vmatpush.bf16.msra.mxu0 %v518
    %782 = vmatmul.bf16.gmra.mxu0 %v707
    %v783 = vpop.f32.mrf.mxu0
    %v784 = vadd.f32 %v166, %v783
    %v785 = vpop.f32.mrf.mxu0
    %786 = vdwg.mxu0
    %787 = vmatpush.bf16.msra.mxu0 0
    %788 = vmatpush.bf16.msra.mxu0 0
    %789 = vmatpush.bf16.msra.mxu0 0
    %790 = vmatpush.bf16.msra.mxu0 0
    %791 = vmatpush.bf16.msra.mxu0 0
    %792 = vmatpush.bf16.msra.mxu0 %v583
    %793 = vmatpush.bf16.msra.mxu0 %v551
    %794 = vmatpush.bf16.msra.mxu0 %v519
    %795 = vmatmul.bf16.gmra.mxu0 %v707
    %v796 = vpop.f32.mrf.mxu0
    %v797 = vadd.f32 %v167, %v796
    %v798 = vpop.f32.mrf.mxu0
    %799 = vdwg.mxu0
    %800 = vmatpush.bf16.msra.mxu0 0
    %801 = vmatpush.bf16.msra.mxu0 0
    %802 = vmatpush.bf16.msra.mxu0 0
    %803 = vmatpush.bf16.msra.mxu0 0
    %804 = vmatpush.bf16.msra.mxu0 0
    %805 = vmatpush.bf16.msra.mxu0 %v584
    %806 = vmatpush.bf16.msra.mxu0 %v552
    %807 = vmatpush.bf16.msra.mxu0 %v520
    %808 = vmatmul.bf16.gmra.mxu0 %v707
    %v809 = vpop.f32.mrf.mxu0
    %v810 = vadd.f32 %v168, %v809
    %v811 = vpop.f32.mrf.mxu0
    %812 = vdwg.mxu0
    %813 = vmatpush.bf16.msra.mxu0 0
    %814 = vmatpush.bf16.msra.mxu0 0
    %815 = vmatpush.bf16.msra.mxu0 0
    %816 = vmatpush.bf16.msra.mxu0 0
    %817 = vmatpush.bf16.msra.mxu0 0
    %818 = vmatpush.bf16.msra.mxu0 %v585
    %819 = vmatpush.bf16.msra.mxu0 %v553
    %820 = vmatpush.bf16.msra.mxu0 %v521
    %821 = vmatmul.bf16.gmra.mxu0 %v707
    %v822 = vpop.f32.mrf.mxu0
    %v823 = vadd.f32 %v169, %v822
    %v824 = vpop.f32.mrf.mxu0
    %825 = vdwg.mxu0
    %826 = vmatpush.bf16.msra.mxu0 0
    %827 = vmatpush.bf16.msra.mxu0 0
    %828 = vmatpush.bf16.msra.mxu0 0
    %829 = vmatpush.bf16.msra.mxu0 0
    %830 = vmatpush.bf16.msra.mxu0 0
    %831 = vmatpush.bf16.msra.mxu0 %v586
    %832 = vmatpush.bf16.msra.mxu0 %v554
    %833 = vmatpush.bf16.msra.mxu0 %v522
    %834 = vmatmul.bf16.gmra.mxu0 %v707
    %v835 = vpop.f32.mrf.mxu0
    %v836 = vadd.f32 %v170, %v835
    %v837 = vpop.f32.mrf.mxu0
    %838 = vdwg.mxu0
    %839 = vmatpush.bf16.msra.mxu0 0
    %840 = vmatpush.bf16.msra.mxu0 0
    %841 = vmatpush.bf16.msra.mxu0 0
    %842 = vmatpush.bf16.msra.mxu0 0
    %843 = vmatpush.bf16.msra.mxu0 0
    %844 = vmatpush.bf16.msra.mxu0 %v587
    %845 = vmatpush.bf16.msra.mxu0 %v555
    %846 = vmatpush.bf16.msra.mxu0 %v523
    %847 = vmatmul.bf16.gmra.mxu0 %v707
    %v848 = vpop.f32.mrf.mxu0
    %v849 = vadd.f32 %v171, %v848
    %v850 = vpop.f32.mrf.mxu0
    %851 = vdwg.mxu0
    %852 = vmatpush.bf16.msra.mxu0 0
    %853 = vmatpush.bf16.msra.mxu0 0
    %854 = vmatpush.bf16.msra.mxu0 0
    %855 = vmatpush.bf16.msra.mxu0 0
    %856 = vmatpush.bf16.msra.mxu0 0
    %857 = vmatpush.bf16.msra.mxu0 %v588
    %858 = vmatpush.bf16.msra.mxu0 %v556
    %859 = vmatpush.bf16.msra.mxu0 %v524
    %860 = vmatmul.bf16.gmra.mxu0 %v707
    %v861 = vpop.f32.mrf.mxu0
    %v862 = vadd.f32 %v172, %v861
    %v863 = vpop.f32.mrf.mxu0
    %864 = vdwg.mxu0
    %865 = vmatpush.bf16.msra.mxu0 0
    %866 = vmatpush.bf16.msra.mxu0 0
    %867 = vmatpush.bf16.msra.mxu0 0
    %868 = vmatpush.bf16.msra.mxu0 0
    %869 = vmatpush.bf16.msra.mxu0 0
    %870 = vmatpush.bf16.msra.mxu0 %v589
    %871 = vmatpush.bf16.msra.mxu0 %v557
    %872 = vmatpush.bf16.msra.mxu0 %v525
    %873 = vmatmul.bf16.gmra.mxu0 %v707
    %v874 = vpop.f32.mrf.mxu0
    %v875 = vadd.f32 %v173, %v874
    %v876 = vpop.f32.mrf.mxu0
    %877 = vdwg.mxu0
    %878 = vmatpush.bf16.msra.mxu0 0
    %879 = vmatpush.bf16.msra.mxu0 0
    %880 = vmatpush.bf16.msra.mxu0 0
    %881 = vmatpush.bf16.msra.mxu0 0
    %882 = vmatpush.bf16.msra.mxu0 0
    %883 = vmatpush.bf16.msra.mxu0 %v590
    %884 = vmatpush.bf16.msra.mxu0 %v558
    %885 = vmatpush.bf16.msra.mxu0 %v526
    %886 = vmatmul.bf16.gmra.mxu0 %v707
    %v887 = vpop.f32.mrf.mxu0
    %v888 = vadd.f32 %v174, %v887
    %v889 = vpop.f32.mrf.mxu0
    %890 = vdwg.mxu0
    %891 = vmatpush.bf16.msra.mxu0 0
    %892 = vmatpush.bf16.msra.mxu0 0
    %893 = vmatpush.bf16.msra.mxu0 0
    %894 = vmatpush.bf16.msra.mxu0 0
    %895 = vmatpush.bf16.msra.mxu0 0
    %896 = vmatpush.bf16.msra.mxu0 %v591
    %897 = vmatpush.bf16.msra.mxu0 %v559
    %898 = vmatpush.bf16.msra.mxu0 %v527
    %899 = vmatmul.bf16.gmra.mxu0 %v707
    %v900 = vpop.f32.mrf.mxu0
    %v901 = vadd.f32 %v175, %v900
    %v902 = vpop.f32.mrf.mxu0
    %903 = vdwg.mxu0
    %904 = vmatpush.bf16.msra.mxu0 0
    %905 = vmatpush.bf16.msra.mxu0 0
    %906 = vmatpush.bf16.msra.mxu0 0
    %907 = vmatpush.bf16.msra.mxu0 0
    %908 = vmatpush.bf16.msra.mxu0 0
    %909 = vmatpush.bf16.msra.mxu0 %v592
    %910 = vmatpush.bf16.msra.mxu0 %v560
    %911 = vmatpush.bf16.msra.mxu0 %v528
    %912 = vmatmul.bf16.gmra.mxu0 %v707
    %v913 = vpop.f32.mrf.mxu0
    %v914 = vadd.f32 %v176, %v913
    %v915 = vpop.f32.mrf.mxu0
    %916 = vdwg.mxu0
    %917 = vmatpush.bf16.msra.mxu0 0
    %918 = vmatpush.bf16.msra.mxu0 0
    %919 = vmatpush.bf16.msra.mxu0 0
    %920 = vmatpush.bf16.msra.mxu0 0
    %921 = vmatpush.bf16.msra.mxu0 0
    %922 = vmatpush.bf16.msra.mxu0 %v593
    %923 = vmatpush.bf16.msra.mxu0 %v561
    %924 = vmatpush.bf16.msra.mxu0 %v529
    %925 = vmatmul.bf16.gmra.mxu0 %v707
    %v926 = vpop.f32.mrf.mxu0
    %v927 = vadd.f32 %v177, %v926
    %v928 = vpop.f32.mrf.mxu0
    %929 = vdwg.mxu0
    %930 = vmatpush.bf16.msra.mxu0 0
    %931 = vmatpush.bf16.msra.mxu0 0
    %932 = vmatpush.bf16.msra.mxu0 0
    %933 = vmatpush.bf16.msra.mxu0 0
    %934 = vmatpush.bf16.msra.mxu0 0
    %935 = vmatpush.bf16.msra.mxu0 %v594
    %936 = vmatpush.bf16.msra.mxu0 %v562
    %937 = vmatpush.bf16.msra.mxu0 %v530
    %938 = vmatmul.bf16.gmra.mxu0 %v707
    %v939 = vpop.f32.mrf.mxu0
    %v940 = vadd.f32 %v178, %v939
    %v941 = vpop.f32.mrf.mxu0
    %942 = vdwg.mxu0
    %943 = vmatpush.bf16.msra.mxu0 0
    %944 = vmatpush.bf16.msra.mxu0 0
    %945 = vmatpush.bf16.msra.mxu0 0
    %946 = vmatpush.bf16.msra.mxu0 0
    %947 = vmatpush.bf16.msra.mxu0 0
    %948 = vmatpush.bf16.msra.mxu0 %v595
    %949 = vmatpush.bf16.msra.mxu0 %v563
    %950 = vmatpush.bf16.msra.mxu0 %v531
    %951 = vmatmul.bf16.gmra.mxu0 %v707
    %v952 = vpop.f32.mrf.mxu0
    %v953 = vadd.f32 %v179, %v952
    %v954 = vpop.f32.mrf.mxu0
    %955 = vdwg.mxu0
    %956 = vmatpush.bf16.msra.mxu0 0
    %957 = vmatpush.bf16.msra.mxu0 0
    %958 = vmatpush.bf16.msra.mxu0 0
    %959 = vmatpush.bf16.msra.mxu0 0
    %960 = vmatpush.bf16.msra.mxu0 0
    %961 = vmatpush.bf16.msra.mxu0 %v596
    %962 = vmatpush.bf16.msra.mxu0 %v564
    %963 = vmatpush.bf16.msra.mxu0 %v532
    %964 = vmatmul.bf16.gmra.mxu0 %v707
    %v965 = vpop.f32.mrf.mxu0
    %v966 = vadd.f32 %v180, %v965
    %v967 = vpop.f32.mrf.mxu0
    %968 = vdwg.mxu0
    %969 = vmatpush.bf16.msra.mxu0 0
    %970 = vmatpush.bf16.msra.mxu0 0
    %971 = vmatpush.bf16.msra.mxu0 0
    %972 = vmatpush.bf16.msra.mxu0 0
    %973 = vmatpush.bf16.msra.mxu0 0
    %974 = vmatpush.bf16.msra.mxu0 %v597
    %975 = vmatpush.bf16.msra.mxu0 %v565
    %976 = vmatpush.bf16.msra.mxu0 %v533
    %977 = vmatmul.bf16.gmra.mxu0 %v707
    %v978 = vpop.f32.mrf.mxu0
    %v979 = vadd.f32 %v181, %v978
    %v980 = vpop.f32.mrf.mxu0
    %981 = vdwg.mxu0
    %982 = vmatpush.bf16.msra.mxu0 0
    %983 = vmatpush.bf16.msra.mxu0 0
    %984 = vmatpush.bf16.msra.mxu0 0
    %985 = vmatpush.bf16.msra.mxu0 0
    %986 = vmatpush.bf16.msra.mxu0 0
    %987 = vmatpush.bf16.msra.mxu0 %v598
    %988 = vmatpush.bf16.msra.mxu0 %v566
    %989 = vmatpush.bf16.msra.mxu0 %v534
    %990 = vmatmul.bf16.gmra.mxu0 %v707
    %v991 = vpop.f32.mrf.mxu0
    %v992 = vadd.f32 %v182, %v991
    %v993 = vpop.f32.mrf.mxu0
    %994 = vdwg.mxu0
    %995 = vmatpush.bf16.msra.mxu0 0
    %996 = vmatpush.bf16.msra.mxu0 0
    %997 = vmatpush.bf16.msra.mxu0 0
    %998 = vmatpush.bf16.msra.mxu0 0
    %999 = vmatpush.bf16.msra.mxu0 0
    %1000 = vmatpush.bf16.msra.mxu0 %v599
    %1001 = vmatpush.bf16.msra.mxu0 %v567
    %1002 = vmatpush.bf16.msra.mxu0 %v535
    %1003 = vmatmul.bf16.gmra.mxu0 %v707
    %v1004 = vpop.f32.mrf.mxu0
    %v1005 = vadd.f32 %v183, %v1004
    %v1006 = vpop.f32.mrf.mxu0
    %1007 = vdwg.mxu0
    %1008 = vmatpush.bf16.msra.mxu0 0
    %1009 = vmatpush.bf16.msra.mxu0 0
    %1010 = vmatpush.bf16.msra.mxu0 0
    %1011 = vmatpush.bf16.msra.mxu0 0
    %1012 = vmatpush.bf16.msra.mxu0 0
    %1013 = vmatpush.bf16.msra.mxu0 %v600
    %1014 = vmatpush.bf16.msra.mxu0 %v568
    %1015 = vmatpush.bf16.msra.mxu0 %v536
    %1016 = vmatmul.bf16.gmra.mxu0 %v707
    %v1017 = vpop.f32.mrf.mxu0
    %v1018 = vadd.f32 %v184, %v1017
    %v1019 = vpop.f32.mrf.mxu0
    %1020 = vdwg.mxu0
    %1021 = vmatpush.bf16.msra.mxu0 0
    %1022 = vmatpush.bf16.msra.mxu0 0
    %1023 = vmatpush.bf16.msra.mxu0 0
    %1024 = vmatpush.bf16.msra.mxu0 0
    %1025 = vmatpush.bf16.msra.mxu0 0
    %1026 = vmatpush.bf16.msra.mxu0 %v601
    %1027 = vmatpush.bf16.msra.mxu0 %v569
    %1028 = vmatpush.bf16.msra.mxu0 %v537
    %1029 = vmatmul.bf16.gmra.mxu0 %v707
    %v1030 = vpop.f32.mrf.mxu0
    %v1031 = vadd.f32 %v185, %v1030
    %v1032 = vpop.f32.mrf.mxu0
    %1033 = vdwg.mxu0
    %1034 = vmatpush.bf16.msra.mxu0 0
    %1035 = vmatpush.bf16.msra.mxu0 0
    %1036 = vmatpush.bf16.msra.mxu0 0
    %1037 = vmatpush.bf16.msra.mxu0 0
    %1038 = vmatpush.bf16.msra.mxu0 0
    %1039 = vmatpush.bf16.msra.mxu0 %v602
    %1040 = vmatpush.bf16.msra.mxu0 %v570
    %1041 = vmatpush.bf16.msra.mxu0 %v538
    %1042 = vmatmul.bf16.gmra.mxu0 %v707
    %v1043 = vpop.f32.mrf.mxu0
    %v1044 = vadd.f32 %v186, %v1043
    %v1045 = vpop.f32.mrf.mxu0
    %1046 = vdwg.mxu0
    %1047 = vmatpush.bf16.msra.mxu0 0
    %1048 = vmatpush.bf16.msra.mxu0 0
    %1049 = vmatpush.bf16.msra.mxu0 0
    %1050 = vmatpush.bf16.msra.mxu0 0
    %1051 = vmatpush.bf16.msra.mxu0 0
    %1052 = vmatpush.bf16.msra.mxu0 %v603
    %1053 = vmatpush.bf16.msra.mxu0 %v571
    %1054 = vmatpush.bf16.msra.mxu0 %v539
    %1055 = vmatmul.bf16.gmra.mxu0 %v707
    %v1056 = vpop.f32.mrf.mxu0
    %v1057 = vadd.f32 %v187, %v1056
    %v1058 = vpop.f32.mrf.mxu0
    %1059 = vdwg.mxu0
    %1060 = vmatpush.bf16.msra.mxu0 0
    %1061 = vmatpush.bf16.msra.mxu0 0
    %1062 = vmatpush.bf16.msra.mxu0 0
    %1063 = vmatpush.bf16.msra.mxu0 0
    %1064 = vmatpush.bf16.msra.mxu0 0
    %1065 = vmatpush.bf16.msra.mxu0 %v604
    %1066 = vmatpush.bf16.msra.mxu0 %v572
    %1067 = vmatpush.bf16.msra.mxu0 %v540
    %1068 = vmatmul.bf16.gmra.mxu0 %v707
    %v1069 = vpop.f32.mrf.mxu0
    %v1070 = vadd.f32 %v188, %v1069
    %v1071 = vpop.f32.mrf.mxu0
    %1072 = vdwg.mxu0
    %1073 = vmatpush.bf16.msra.mxu0 0
    %1074 = vmatpush.bf16.msra.mxu0 0
    %1075 = vmatpush.bf16.msra.mxu0 0
    %1076 = vmatpush.bf16.msra.mxu0 0
    %1077 = vmatpush.bf16.msra.mxu0 0
    %1078 = vmatpush.bf16.msra.mxu0 %v605
    %1079 = vmatpush.bf16.msra.mxu0 %v573
    %1080 = vmatpush.bf16.msra.mxu0 %v541
    %1081 = vmatmul.bf16.gmra.mxu0 %v707
    %v1082 = vpop.f32.mrf.mxu0
    %v1083 = vadd.f32 %v189, %v1082
    %v1084 = vpop.f32.mrf.mxu0
    %1085 = vdwg.mxu0
    %1086 = vmatpush.bf16.msra.mxu0 0
    %1087 = vmatpush.bf16.msra.mxu0 0
    %1088 = vmatpush.bf16.msra.mxu0 0
    %1089 = vmatpush.bf16.msra.mxu0 0
    %1090 = vmatpush.bf16.msra.mxu0 0
    %1091 = vmatpush.bf16.msra.mxu0 %v606
    %1092 = vmatpush.bf16.msra.mxu0 %v574
    %1093 = vmatpush.bf16.msra.mxu0 %v542
    %1094 = vmatmul.bf16.gmra.mxu0 %v707
    %v1095 = vpop.f32.mrf.mxu0
    %v1096 = vadd.f32 %v190, %v1095
    %v1097 = vpop.f32.mrf.mxu0
    %1098 = vdwg.mxu0
    %1099 = vmatpush.bf16.msra.mxu0 0
    %1100 = vmatpush.bf16.msra.mxu0 0
    %1101 = vmatpush.bf16.msra.mxu0 0
    %1102 = vmatpush.bf16.msra.mxu0 0
    %1103 = vmatpush.bf16.msra.mxu0 0
    %1104 = vmatpush.bf16.msra.mxu0 %v607
    %1105 = vmatpush.bf16.msra.mxu0 %v575
    %1106 = vmatpush.bf16.msra.mxu0 %v543
    %1107 = vmatmul.bf16.gmra.mxu0 %v707
    %v1108 = vpop.f32.mrf.mxu0
    %v1109 = vadd.f32 %v191, %v1108
    %v1110 = vpop.f32.mrf.mxu0
    %1111 = vdwg.mxu0
    %1112 = vmatpush.bf16.msra.mxu0 0
    %1113 = vmatpush.bf16.msra.mxu0 0
    %1114 = vmatpush.bf16.msra.mxu0 0
    %1115 = vmatpush.bf16.msra.mxu0 0
    %1116 = vmatpush.bf16.msra.mxu0 0
    %1117 = vmatpush.bf16.msra.mxu0 %v608
    %1118 = vmatpush.bf16.msra.mxu0 %v576
    %1119 = vmatpush.bf16.msra.mxu0 %v544
    %1120 = vmatmul.bf16.gmra.mxu0 %v707
    %v1121 = vpop.f32.mrf.mxu0
    %v1122 = vadd.f32 %v192, %v1121
    %v1123 = vpop.f32.mrf.mxu0
    %1124 = vdwg.mxu0
    %v1125 = vmax.f32 %v719, 0.0
    %v1126 = vmax.f32 %v732, 0.0
    %v1127 = vmax.f32 %v745, 0.0
    %v1128 = vmax.f32 %v758, 0.0
    %v1129 = vmax.f32 %v771, 0.0
    %v1130 = vmax.f32 %v784, 0.0
    %v1131 = vmax.f32 %v797, 0.0
    %v1132 = vmax.f32 %v810, 0.0
    %v1133 = vmax.f32 %v823, 0.0
    %v1134 = vmax.f32 %v836, 0.0
    %v1135 = vmax.f32 %v849, 0.0
    %v1136 = vmax.f32 %v862, 0.0
    %v1137 = vmax.f32 %v875, 0.0
    %v1138 = vmax.f32 %v888, 0.0
    %v1139 = vmax.f32 %v901, 0.0
    %v1140 = vmax.f32 %v914, 0.0
    %v1141 = vmax.f32 %v927, 0.0
    %v1142 = vmax.f32 %v940, 0.0
    %v1143 = vmax.f32 %v953, 0.0
    %v1144 = vmax.f32 %v966, 0.0
    %v1145 = vmax.f32 %v979, 0.0
    %v1146 = vmax.f32 %v992, 0.0
    %v1147 = vmax.f32 %v1005, 0.0
    %v1148 = vmax.f32 %v1018, 0.0
    %v1149 = vmax.f32 %v1031, 0.0
    %v1150 = vmax.f32 %v1044, 0.0
    %v1151 = vmax.f32 %v1057, 0.0
    %v1152 = vmax.f32 %v1070, 0.0
    %v1153 = vmax.f32 %v1083, 0.0
    %v1154 = vmax.f32 %v1096, 0.0
    %v1155 = vmax.f32 %v1109, 0.0
    %v1156 = vmax.f32 %v1122, 0.0
    %v1157 = vpack.c.bf16 %v1126, %v1125
    %v1158 = vpack.c.bf16 %v1128, %v1127
    %v1159 = vpack.c.bf16 %v1130, %v1129
    %v1160 = vpack.c.bf16 %v1132, %v1131
    %v1161 = vpack.c.bf16 %v1134, %v1133
    %v1162 = vpack.c.bf16 %v1136, %v1135
    %v1163 = vpack.c.bf16 %v1138, %v1137
    %v1164 = vpack.c.bf16 %v1140, %v1139
    %v1165 = vpack.c.bf16 %v1142, %v1141
    %v1166 = vpack.c.bf16 %v1144, %v1143
    %v1167 = vpack.c.bf16 %v1146, %v1145
    %v1168 = vpack.c.bf16 %v1148, %v1147
    %v1169 = vpack.c.bf16 %v1150, %v1149
    %v1170 = vpack.c.bf16 %v1152, %v1151
    %v1171 = vpack.c.bf16 %v1154, %v1153
    %v1172 = vpack.c.bf16 %v1156, %v1155
    %v1173 = vld [vmem:[#allocation4] sm:$0xf]
    %v1174 = vld [vmem:[#allocation4 + $0x4] sm:$0xf]
    %v1175 = vld [vmem:[#allocation4 + $0x8] sm:$0xf]
    %v1176 = vld [vmem:[#allocation4 + $0xc] sm:$0xf]
    %v1177 = vld [vmem:[#allocation4 + $0x10] sm:$0xf]
    %v1178 = vld [vmem:[#allocation4 + $0x14] sm:$0xf]
    %v1179 = vld [vmem:[#allocation4 + $0x18] sm:$0xf]
    %v1180 = vld [vmem:[#allocation4 + $0x1c] sm:$0xf]
    %v1181 = vld [vmem:[#allocation4 + $0x20] sm:$0xf]
    %v1182 = vld [vmem:[#allocation4 + $0x24] sm:$0xf]
    %v1183 = vld [vmem:[#allocation4 + $0x28] sm:$0xf]
    %v1184 = vld [vmem:[#allocation4 + $0x2c] sm:$0xf]
    %v1185 = vld [vmem:[#allocation4 + $0x30] sm:$0xf]
    %v1186 = vld [vmem:[#allocation4 + $0x34] sm:$0xf]
    %v1187 = vld [vmem:[#allocation4 + $0x38] sm:$0xf]
    %v1188 = vld [vmem:[#allocation4 + $0x3c] sm:$0xf]
    %v1189 = vld [vmem:[#allocation4 + $0x40] sm:$0xf]
    %v1190 = vld [vmem:[#allocation4 + $0x44] sm:$0xf]
    %v1191 = vld [vmem:[#allocation4 + $0x48] sm:$0xf]
    %v1192 = vld [vmem:[#allocation4 + $0x4c] sm:$0xf]
    %v1193 = vld [vmem:[#allocation4 + $0x50] sm:$0xf]
    %v1194 = vld [vmem:[#allocation4 + $0x54] sm:$0xf]
    %v1195 = vld [vmem:[#allocation4 + $0x58] sm:$0xf]
    %v1196 = vld [vmem:[#allocation4 + $0x5c] sm:$0xf]
    %v1197 = vld [vmem:[#allocation4 + $0x60] sm:$0xf]
    %v1198 = vld [vmem:[#allocation4 + $0x64] sm:$0xf]
    %v1199 = vld [vmem:[#allocation4 + $0x68] sm:$0xf]
    %v1200 = vld [vmem:[#allocation4 + $0x6c] sm:$0xf]
    %v1201 = vld [vmem:[#allocation4 + $0x70] sm:$0xf]
    %v1202 = vld [vmem:[#allocation4 + $0x74] sm:$0xf]
    %v1203 = vld [vmem:[#allocation4 + $0x78] sm:$0xf]
    %v1204 = vld [vmem:[#allocation4 + $0x7c] sm:$0xf]
    %v1205 = vld [vmem:[#allocation4 + $0x80] sm:$0xf]
    %v1206 = vld [vmem:[#allocation4 + $0x84] sm:$0xf]
    %v1207 = vld [vmem:[#allocation4 + $0x88] sm:$0xf]
    %v1208 = vld [vmem:[#allocation4 + $0x8c] sm:$0xf]
    %v1209 = vld [vmem:[#allocation4 + $0x90] sm:$0xf]
    %v1210 = vld [vmem:[#allocation4 + $0x94] sm:$0xf]
    %v1211 = vld [vmem:[#allocation4 + $0x98] sm:$0xf]
    %v1212 = vld [vmem:[#allocation4 + $0x9c] sm:$0xf]
    %v1213 = vld [vmem:[#allocation4 + $0xa0] sm:$0xf]
    %v1214 = vld [vmem:[#allocation4 + $0xa4] sm:$0xf]
    %v1215 = vld [vmem:[#allocation4 + $0xa8] sm:$0xf]
    %v1216 = vld [vmem:[#allocation4 + $0xac] sm:$0xf]
    %v1217 = vld [vmem:[#allocation4 + $0xb0] sm:$0xf]
    %v1218 = vld [vmem:[#allocation4 + $0xb4] sm:$0xf]
    %v1219 = vld [vmem:[#allocation4 + $0xb8] sm:$0xf]
    %v1220 = vld [vmem:[#allocation4 + $0xbc] sm:$0xf]
    %v1221 = vld [vmem:[#allocation4 + $0xc0] sm:$0xf]
    %v1222 = vld [vmem:[#allocation4 + $0xc4] sm:$0xf]
    %v1223 = vld [vmem:[#allocation4 + $0xc8] sm:$0xf]
    %v1224 = vld [vmem:[#allocation4 + $0xcc] sm:$0xf]
    %v1225 = vld [vmem:[#allocation4 + $0xd0] sm:$0xf]
    %v1226 = vld [vmem:[#allocation4 + $0xd4] sm:$0xf]
    %v1227 = vld [vmem:[#allocation4 + $0xd8] sm:$0xf]
    %v1228 = vld [vmem:[#allocation4 + $0xdc] sm:$0xf]
    %v1229 = vld [vmem:[#allocation4 + $0xe0] sm:$0xf]
    %v1230 = vld [vmem:[#allocation4 + $0xe4] sm:$0xf]
    %v1231 = vld [vmem:[#allocation4 + $0xe8] sm:$0xf]
    %v1232 = vld [vmem:[#allocation4 + $0xec] sm:$0xf]
    %v1233 = vld [vmem:[#allocation4 + $0xf0] sm:$0xf]
    %v1234 = vld [vmem:[#allocation4 + $0xf4] sm:$0xf]
    %v1235 = vld [vmem:[#allocation4 + $0xf8] sm:$0xf]
    %v1236 = vld [vmem:[#allocation4 + $0xfc] sm:$0xf]
    %v1237 = vld [vmem:[#allocation4 + $0x100] sm:$0xf]
    %v1238 = vld [vmem:[#allocation4 + $0x104] sm:$0xf]
    %v1239 = vld [vmem:[#allocation4 + $0x108] sm:$0xf]
    %v1240 = vld [vmem:[#allocation4 + $0x10c] sm:$0xf]
    %v1241 = vld [vmem:[#allocation4 + $0x110] sm:$0xf]
    %v1242 = vld [vmem:[#allocation4 + $0x114] sm:$0xf]
    %v1243 = vld [vmem:[#allocation4 + $0x118] sm:$0xf]
    %v1244 = vld [vmem:[#allocation4 + $0x11c] sm:$0xf]
    %v1245 = vld [vmem:[#allocation4 + $0x120] sm:$0xf]
    %v1246 = vld [vmem:[#allocation4 + $0x124] sm:$0xf]
    %v1247 = vld [vmem:[#allocation4 + $0x128] sm:$0xf]
    %v1248 = vld [vmem:[#allocation4 + $0x12c] sm:$0xf]
    %v1249 = vld [vmem:[#allocation4 + $0x130] sm:$0xf]
    %v1250 = vld [vmem:[#allocation4 + $0x134] sm:$0xf]
    %v1251 = vld [vmem:[#allocation4 + $0x138] sm:$0xf]
    %v1252 = vld [vmem:[#allocation4 + $0x13c] sm:$0xf]
    %v1253 = vld [vmem:[#allocation4 + $0x140] sm:$0xf]
    %v1254 = vld [vmem:[#allocation4 + $0x144] sm:$0xf]
    %v1255 = vld [vmem:[#allocation4 + $0x148] sm:$0xf]
    %v1256 = vld [vmem:[#allocation4 + $0x14c] sm:$0xf]
    %v1257 = vld [vmem:[#allocation4 + $0x150] sm:$0xf]
    %v1258 = vld [vmem:[#allocation4 + $0x154] sm:$0xf]
    %v1259 = vld [vmem:[#allocation4 + $0x158] sm:$0xf]
    %v1260 = vld [vmem:[#allocation4 + $0x15c] sm:$0xf]
    %v1261 = vld [vmem:[#allocation4 + $0x160] sm:$0xf]
    %v1262 = vld [vmem:[#allocation4 + $0x164] sm:$0xf]
    %v1263 = vld [vmem:[#allocation4 + $0x168] sm:$0xf]
    %v1264 = vld [vmem:[#allocation4 + $0x16c] sm:$0xf]
    %v1265 = vld [vmem:[#allocation4 + $0x170] sm:$0xf]
    %v1266 = vld [vmem:[#allocation4 + $0x174] sm:$0xf]
    %v1267 = vld [vmem:[#allocation4 + $0x178] sm:$0xf]
    %v1268 = vld [vmem:[#allocation4 + $0x17c] sm:$0xf]
    %v1269 = vld [vmem:[#allocation4 + $0x180] sm:$0xf]
    %v1270 = vld [vmem:[#allocation4 + $0x184] sm:$0xf]
    %v1271 = vld [vmem:[#allocation4 + $0x188] sm:$0xf]
    %v1272 = vld [vmem:[#allocation4 + $0x18c] sm:$0xf]
    %v1273 = vld [vmem:[#allocation4 + $0x190] sm:$0xf]
    %v1274 = vld [vmem:[#allocation4 + $0x194] sm:$0xf]
    %v1275 = vld [vmem:[#allocation4 + $0x198] sm:$0xf]
    %v1276 = vld [vmem:[#allocation4 + $0x19c] sm:$0xf]
    %v1277 = vld [vmem:[#allocation4 + $0x1a0] sm:$0xf]
    %v1278 = vld [vmem:[#allocation4 + $0x1a4] sm:$0xf]
    %v1279 = vld [vmem:[#allocation4 + $0x1a8] sm:$0xf]
    %v1280 = vld [vmem:[#allocation4 + $0x1ac] sm:$0xf]
    %v1281 = vld [vmem:[#allocation4 + $0x1b0] sm:$0xf]
    %v1282 = vld [vmem:[#allocation4 + $0x1b4] sm:$0xf]
    %v1283 = vld [vmem:[#allocation4 + $0x1b8] sm:$0xf]
    %v1284 = vld [vmem:[#allocation4 + $0x1bc] sm:$0xf]
    %v1285 = vld [vmem:[#allocation4 + $0x1c0] sm:$0xf]
    %v1286 = vld [vmem:[#allocation4 + $0x1c4] sm:$0xf]
    %v1287 = vld [vmem:[#allocation4 + $0x1c8] sm:$0xf]
    %v1288 = vld [vmem:[#allocation4 + $0x1cc] sm:$0xf]
    %v1289 = vld [vmem:[#allocation4 + $0x1d0] sm:$0xf]
    %v1290 = vld [vmem:[#allocation4 + $0x1d4] sm:$0xf]
    %v1291 = vld [vmem:[#allocation4 + $0x1d8] sm:$0xf]
    %v1292 = vld [vmem:[#allocation4 + $0x1dc] sm:$0xf]
    %v1293 = vld [vmem:[#allocation4 + $0x1e0] sm:$0xf]
    %v1294 = vld [vmem:[#allocation4 + $0x1e4] sm:$0xf]
    %v1295 = vld [vmem:[#allocation4 + $0x1e8] sm:$0xf]
    %v1296 = vld [vmem:[#allocation4 + $0x1ec] sm:$0xf]
    %v1297 = vld [vmem:[#allocation4 + $0x1f0] sm:$0xf]
    %v1298 = vld [vmem:[#allocation4 + $0x1f4] sm:$0xf]
    %v1299 = vld [vmem:[#allocation4 + $0x1f8] sm:$0xf]
    %v1300 = vld [vmem:[#allocation4 + $0x1fc] sm:$0xf]
    %v1301 = vld [vmem:[#allocation4 + $0x200] sm:$0xf]
    %v1302 = vld [vmem:[#allocation4 + $0x204] sm:$0xf]
    %v1303 = vld [vmem:[#allocation4 + $0x208] sm:$0xf]
    %v1304 = vld [vmem:[#allocation4 + $0x20c] sm:$0xf]
    %v1305 = vld [vmem:[#allocation4 + $0x210] sm:$0xf]
    %v1306 = vld [vmem:[#allocation4 + $0x214] sm:$0xf]
    %v1307 = vld [vmem:[#allocation4 + $0x218] sm:$0xf]
    %v1308 = vld [vmem:[#allocation4 + $0x21c] sm:$0xf]
    %v1309 = vld [vmem:[#allocation4 + $0x220] sm:$0xf]
    %v1310 = vld [vmem:[#allocation4 + $0x224] sm:$0xf]
    %v1311 = vld [vmem:[#allocation4 + $0x228] sm:$0xf]
    %v1312 = vld [vmem:[#allocation4 + $0x22c] sm:$0xf]
    %v1313 = vld [vmem:[#allocation4 + $0x230] sm:$0xf]
    %v1314 = vld [vmem:[#allocation4 + $0x234] sm:$0xf]
    %v1315 = vld [vmem:[#allocation4 + $0x238] sm:$0xf]
    %v1316 = vld [vmem:[#allocation4 + $0x23c] sm:$0xf]
    %v1317 = vld [vmem:[#allocation4 + $0x240] sm:$0xf]
    %v1318 = vld [vmem:[#allocation4 + $0x244] sm:$0xf]
    %v1319 = vld [vmem:[#allocation4 + $0x248] sm:$0xf]
    %v1320 = vld [vmem:[#allocation4 + $0x24c] sm:$0xf]
    %v1321 = vld [vmem:[#allocation4 + $0x250] sm:$0xf]
    %v1322 = vld [vmem:[#allocation4 + $0x254] sm:$0xf]
    %v1323 = vld [vmem:[#allocation4 + $0x258] sm:$0xf]
    %v1324 = vld [vmem:[#allocation4 + $0x25c] sm:$0xf]
    %v1325 = vld [vmem:[#allocation4 + $0x260] sm:$0xf]
    %v1326 = vld [vmem:[#allocation4 + $0x264] sm:$0xf]
    %v1327 = vld [vmem:[#allocation4 + $0x268] sm:$0xf]
    %v1328 = vld [vmem:[#allocation4 + $0x26c] sm:$0xf]
    %v1329 = vld [vmem:[#allocation4 + $0x270] sm:$0xf]
    %v1330 = vld [vmem:[#allocation4 + $0x274] sm:$0xf]
    %v1331 = vld [vmem:[#allocation4 + $0x278] sm:$0xf]
    %v1332 = vld [vmem:[#allocation4 + $0x27c] sm:$0xf]
    %v1333 = vld [vmem:[#allocation4 + $0x280] sm:$0xf]
    %v1334 = vld [vmem:[#allocation4 + $0x284] sm:$0xf]
    %v1335 = vld [vmem:[#allocation4 + $0x288] sm:$0xf]
    %v1336 = vld [vmem:[#allocation4 + $0x28c] sm:$0xf]
    %v1337 = vld [vmem:[#allocation4 + $0x290] sm:$0xf]
    %v1338 = vld [vmem:[#allocation4 + $0x294] sm:$0xf]
    %v1339 = vld [vmem:[#allocation4 + $0x298] sm:$0xf]
    %v1340 = vld [vmem:[#allocation4 + $0x29c] sm:$0xf]
    %v1341 = vld [vmem:[#allocation4 + $0x2a0] sm:$0xf]
    %v1342 = vld [vmem:[#allocation4 + $0x2a4] sm:$0xf]
    %v1343 = vld [vmem:[#allocation4 + $0x2a8] sm:$0xf]
    %v1344 = vld [vmem:[#allocation4 + $0x2ac] sm:$0xf]
    %v1345 = vld [vmem:[#allocation4 + $0x2b0] sm:$0xf]
    %v1346 = vld [vmem:[#allocation4 + $0x2b4] sm:$0xf]
    %v1347 = vld [vmem:[#allocation4 + $0x2b8] sm:$0xf]
    %v1348 = vld [vmem:[#allocation4 + $0x2bc] sm:$0xf]
    %v1349 = vld [vmem:[#allocation4 + $0x2c0] sm:$0xf]
    %v1350 = vld [vmem:[#allocation4 + $0x2c4] sm:$0xf]
    %v1351 = vld [vmem:[#allocation4 + $0x2c8] sm:$0xf]
    %v1352 = vld [vmem:[#allocation4 + $0x2cc] sm:$0xf]
    %v1353 = vld [vmem:[#allocation4 + $0x2d0] sm:$0xf]
    %v1354 = vld [vmem:[#allocation4 + $0x2d4] sm:$0xf]
    %v1355 = vld [vmem:[#allocation4 + $0x2d8] sm:$0xf]
    %v1356 = vld [vmem:[#allocation4 + $0x2dc] sm:$0xf]
    %v1357 = vld [vmem:[#allocation4 + $0x2e0] sm:$0xf]
    %v1358 = vld [vmem:[#allocation4 + $0x2e4] sm:$0xf]
    %v1359 = vld [vmem:[#allocation4 + $0x2e8] sm:$0xf]
    %v1360 = vld [vmem:[#allocation4 + $0x2ec] sm:$0xf]
    %v1361 = vld [vmem:[#allocation4 + $0x2f0] sm:$0xf]
    %v1362 = vld [vmem:[#allocation4 + $0x2f4] sm:$0xf]
    %v1363 = vld [vmem:[#allocation4 + $0x2f8] sm:$0xf]
    %v1364 = vld [vmem:[#allocation4 + $0x2fc] sm:$0xf]
    %v1365 = vld [vmem:[#allocation4 + $0x300] sm:$0xf]
    %v1366 = vld [vmem:[#allocation4 + $0x304] sm:$0xf]
    %v1367 = vld [vmem:[#allocation4 + $0x308] sm:$0xf]
    %v1368 = vld [vmem:[#allocation4 + $0x30c] sm:$0xf]
    %v1369 = vld [vmem:[#allocation4 + $0x310] sm:$0xf]
    %v1370 = vld [vmem:[#allocation4 + $0x314] sm:$0xf]
    %v1371 = vld [vmem:[#allocation4 + $0x318] sm:$0xf]
    %v1372 = vld [vmem:[#allocation4 + $0x31c] sm:$0xf]
    %v1373 = vld [vmem:[#allocation4 + $0x320] sm:$0xf]
    %v1374 = vld [vmem:[#allocation4 + $0x324] sm:$0xf]
    %v1375 = vld [vmem:[#allocation4 + $0x328] sm:$0xf]
    %v1376 = vld [vmem:[#allocation4 + $0x32c] sm:$0xf]
    %v1377 = vld [vmem:[#allocation4 + $0x330] sm:$0xf]
    %v1378 = vld [vmem:[#allocation4 + $0x334] sm:$0xf]
    %v1379 = vld [vmem:[#allocation4 + $0x338] sm:$0xf]
    %v1380 = vld [vmem:[#allocation4 + $0x33c] sm:$0xf]
    %v1381 = vld [vmem:[#allocation4 + $0x340] sm:$0xf]
    %v1382 = vld [vmem:[#allocation4 + $0x344] sm:$0xf]
    %v1383 = vld [vmem:[#allocation4 + $0x348] sm:$0xf]
    %v1384 = vld [vmem:[#allocation4 + $0x34c] sm:$0xf]
    %v1385 = vld [vmem:[#allocation4 + $0x350] sm:$0xf]
    %v1386 = vld [vmem:[#allocation4 + $0x354] sm:$0xf]
    %v1387 = vld [vmem:[#allocation4 + $0x358] sm:$0xf]
    %v1388 = vld [vmem:[#allocation4 + $0x35c] sm:$0xf]
    %v1389 = vld [vmem:[#allocation4 + $0x360] sm:$0xf]
    %v1390 = vld [vmem:[#allocation4 + $0x364] sm:$0xf]
    %v1391 = vld [vmem:[#allocation4 + $0x368] sm:$0xf]
    %v1392 = vld [vmem:[#allocation4 + $0x36c] sm:$0xf]
    %v1393 = vld [vmem:[#allocation4 + $0x370] sm:$0xf]
    %v1394 = vld [vmem:[#allocation4 + $0x374] sm:$0xf]
    %v1395 = vld [vmem:[#allocation4 + $0x378] sm:$0xf]
    %v1396 = vld [vmem:[#allocation4 + $0x37c] sm:$0xf]
    %v1397 = vld [vmem:[#allocation4 + $0x380] sm:$0xf]
    %v1398 = vld [vmem:[#allocation4 + $0x384] sm:$0xf]
    %v1399 = vld [vmem:[#allocation4 + $0x388] sm:$0xf]
    %v1400 = vld [vmem:[#allocation4 + $0x38c] sm:$0xf]
    %v1401 = vld [vmem:[#allocation4 + $0x390] sm:$0xf]
    %v1402 = vld [vmem:[#allocation4 + $0x394] sm:$0xf]
    %v1403 = vld [vmem:[#allocation4 + $0x398] sm:$0xf]
    %v1404 = vld [vmem:[#allocation4 + $0x39c] sm:$0xf]
    %v1405 = vld [vmem:[#allocation4 + $0x3a0] sm:$0xf]
    %v1406 = vld [vmem:[#allocation4 + $0x3a4] sm:$0xf]
    %v1407 = vld [vmem:[#allocation4 + $0x3a8] sm:$0xf]
    %v1408 = vld [vmem:[#allocation4 + $0x3ac] sm:$0xf]
    %v1409 = vld [vmem:[#allocation4 + $0x3b0] sm:$0xf]
    %v1410 = vld [vmem:[#allocation4 + $0x3b4] sm:$0xf]
    %v1411 = vld [vmem:[#allocation4 + $0x3b8] sm:$0xf]
    %v1412 = vld [vmem:[#allocation4 + $0x3bc] sm:$0xf]
    %v1413 = vld [vmem:[#allocation4 + $0x3c0] sm:$0xf]
    %v1414 = vld [vmem:[#allocation4 + $0x3c4] sm:$0xf]
    %v1415 = vld [vmem:[#allocation4 + $0x3c8] sm:$0xf]
    %v1416 = vld [vmem:[#allocation4 + $0x3cc] sm:$0xf]
    %v1417 = vld [vmem:[#allocation4 + $0x3d0] sm:$0xf]
    %v1418 = vld [vmem:[#allocation4 + $0x3d4] sm:$0xf]
    %v1419 = vld [vmem:[#allocation4 + $0x3d8] sm:$0xf]
    %v1420 = vld [vmem:[#allocation4 + $0x3dc] sm:$0xf]
    %v1421 = vld [vmem:[#allocation4 + $0x3e0] sm:$0xf]
    %v1422 = vld [vmem:[#allocation4 + $0x3e4] sm:$0xf]
    %v1423 = vld [vmem:[#allocation4 + $0x3e8] sm:$0xf]
    %v1424 = vld [vmem:[#allocation4 + $0x3ec] sm:$0xf]
    %v1425 = vld [vmem:[#allocation4 + $0x3f0] sm:$0xf]
    %v1426 = vld [vmem:[#allocation4 + $0x3f4] sm:$0xf]
    %v1427 = vld [vmem:[#allocation4 + $0x3f8] sm:$0xf]
    %v1428 = vld [vmem:[#allocation4 + $0x3fc] sm:$0xf]
    %v1437 = vunpack.c.l.b16 %v1157
    %v1438 = vunpack.c.h.b16 %v1157
    %v1439 = vunpack.c.l.b16 %v1158
    %v1440 = vunpack.c.h.b16 %v1158
    %v1441 = vunpack.c.l.b16 %v1159
    %v1442 = vunpack.c.h.b16 %v1159
    %v1443 = vunpack.c.l.b16 %v1160
    %v1444 = vunpack.c.h.b16 %v1160
    %v1445 = vunpack.c.l.b16 %v1161
    %v1446 = vunpack.c.h.b16 %v1161
    %v1447 = vunpack.c.l.b16 %v1162
    %v1448 = vunpack.c.h.b16 %v1162
    %v1449 = vunpack.c.l.b16 %v1163
    %v1450 = vunpack.c.h.b16 %v1163
    %v1451 = vunpack.c.l.b16 %v1164
    %v1452 = vunpack.c.h.b16 %v1164
    %v1453 = vpack.c.b16 %v1437, %v1437
    %v1454 = vpack.c.b16 %v1438, %v1438
    %v1455 = vpack.c.b16 %v1439, %v1439
    %v1456 = vpack.c.b16 %v1440, %v1440
    %v1457 = vpack.c.b16 %v1441, %v1441
    %v1458 = vpack.c.b16 %v1442, %v1442
    %v1459 = vpack.c.b16 %v1443, %v1443
    %v1460 = vpack.c.b16 %v1444, %v1444
    %v1461 = vpack.c.b16 %v1445, %v1445
    %v1462 = vpack.c.b16 %v1446, %v1446
    %v1463 = vpack.c.b16 %v1447, %v1447
    %v1464 = vpack.c.b16 %v1448, %v1448
    %v1465 = vpack.c.b16 %v1449, %v1449
    %v1466 = vpack.c.b16 %v1450, %v1450
    %v1467 = vpack.c.b16 %v1451, %v1451
    %v1468 = vpack.c.b16 %v1452, %v1452
    %v1741 = vunpack.c.l.b16 %v1173
    %v1742 = vunpack.c.l.b16 %v1174
    %v1743 = vunpack.c.l.b16 %v1175
    %v1744 = vunpack.c.l.b16 %v1176
    %v1745 = vunpack.c.l.b16 %v1177
    %v1746 = vunpack.c.l.b16 %v1178
    %v1747 = vunpack.c.l.b16 %v1179
    %v1748 = vunpack.c.l.b16 %v1180
    %v1749 = vunpack.c.l.b16 %v1181
    %v1750 = vunpack.c.l.b16 %v1182
    %v1751 = vunpack.c.l.b16 %v1183
    %v1752 = vunpack.c.l.b16 %v1184
    %v1753 = vunpack.c.l.b16 %v1185
    %v1754 = vunpack.c.l.b16 %v1186
    %v1755 = vunpack.c.l.b16 %v1187
    %v1756 = vunpack.c.l.b16 %v1188
    %v1757 = vunpack.c.l.b16 %v1189
    %v1758 = vunpack.c.l.b16 %v1190
    %v1759 = vunpack.c.l.b16 %v1191
    %v1760 = vunpack.c.l.b16 %v1192
    %v1761 = vunpack.c.l.b16 %v1193
    %v1762 = vunpack.c.l.b16 %v1194
    %v1763 = vunpack.c.l.b16 %v1195
    %v1764 = vunpack.c.l.b16 %v1196
    %v1765 = vunpack.c.l.b16 %v1197
    %v1766 = vunpack.c.l.b16 %v1198
    %v1767 = vunpack.c.l.b16 %v1199
    %v1768 = vunpack.c.l.b16 %v1200
    %v1769 = vunpack.c.l.b16 %v1201
    %v1770 = vunpack.c.l.b16 %v1202
    %v1771 = vunpack.c.l.b16 %v1203
    %v1772 = vunpack.c.l.b16 %v1204
    %v1773 = vunpack.c.l.b16 %v1205
    %v1774 = vunpack.c.l.b16 %v1206
    %v1775 = vunpack.c.l.b16 %v1207
    %v1776 = vunpack.c.l.b16 %v1208
    %v1777 = vunpack.c.l.b16 %v1209
    %v1778 = vunpack.c.l.b16 %v1210
    %v1779 = vunpack.c.l.b16 %v1211
    %v1780 = vunpack.c.l.b16 %v1212
    %v1781 = vunpack.c.l.b16 %v1213
    %v1782 = vunpack.c.l.b16 %v1214
    %v1783 = vunpack.c.l.b16 %v1215
    %v1784 = vunpack.c.l.b16 %v1216
    %v1785 = vunpack.c.l.b16 %v1217
    %v1786 = vunpack.c.l.b16 %v1218
    %v1787 = vunpack.c.l.b16 %v1219
    %v1788 = vunpack.c.l.b16 %v1220
    %v1789 = vunpack.c.l.b16 %v1221
    %v1790 = vunpack.c.l.b16 %v1222
    %v1791 = vunpack.c.l.b16 %v1223
    %v1792 = vunpack.c.l.b16 %v1224
    %v1793 = vunpack.c.l.b16 %v1225
    %v1794 = vunpack.c.l.b16 %v1226
    %v1795 = vunpack.c.l.b16 %v1227
    %v1796 = vunpack.c.l.b16 %v1228
    %v1797 = vunpack.c.l.b16 %v1229
    %v1798 = vunpack.c.l.b16 %v1230
    %v1799 = vunpack.c.l.b16 %v1231
    %v1800 = vunpack.c.l.b16 %v1232
    %v1801 = vunpack.c.l.b16 %v1233
    %v1802 = vunpack.c.l.b16 %v1234
    %v1803 = vunpack.c.l.b16 %v1235
    %v1804 = vunpack.c.l.b16 %v1236
    %v1805 = vunpack.c.l.b16 %v1237
    %v1806 = vunpack.c.l.b16 %v1238
    %v1807 = vunpack.c.l.b16 %v1239
    %v1808 = vunpack.c.l.b16 %v1240
    %v1809 = vunpack.c.l.b16 %v1241
    %v1810 = vunpack.c.l.b16 %v1242
    %v1811 = vunpack.c.l.b16 %v1243
    %v1812 = vunpack.c.l.b16 %v1244
    %v1813 = vunpack.c.l.b16 %v1245
    %v1814 = vunpack.c.l.b16 %v1246
    %v1815 = vunpack.c.l.b16 %v1247
    %v1816 = vunpack.c.l.b16 %v1248
    %v1817 = vunpack.c.l.b16 %v1249
    %v1818 = vunpack.c.l.b16 %v1250
    %v1819 = vunpack.c.l.b16 %v1251
    %v1820 = vunpack.c.l.b16 %v1252
    %v1821 = vunpack.c.l.b16 %v1253
    %v1822 = vunpack.c.l.b16 %v1254
    %v1823 = vunpack.c.l.b16 %v1255
    %v1824 = vunpack.c.l.b16 %v1256
    %v1825 = vunpack.c.l.b16 %v1257
    %v1826 = vunpack.c.l.b16 %v1258
    %v1827 = vunpack.c.l.b16 %v1259
    %v1828 = vunpack.c.l.b16 %v1260
    %v1829 = vunpack.c.l.b16 %v1261
    %v1830 = vunpack.c.l.b16 %v1262
    %v1831 = vunpack.c.l.b16 %v1263
    %v1832 = vunpack.c.l.b16 %v1264
    %v1833 = vunpack.c.l.b16 %v1265
    %v1834 = vunpack.c.l.b16 %v1266
    %v1835 = vunpack.c.l.b16 %v1267
    %v1836 = vunpack.c.l.b16 %v1268
    %v1837 = vunpack.c.l.b16 %v1269
    %v1838 = vunpack.c.l.b16 %v1270
    %v1839 = vunpack.c.l.b16 %v1271
    %v1840 = vunpack.c.l.b16 %v1272
    %v1841 = vunpack.c.l.b16 %v1273
    %v1842 = vunpack.c.l.b16 %v1274
    %v1843 = vunpack.c.l.b16 %v1275
    %v1844 = vunpack.c.l.b16 %v1276
    %v1845 = vunpack.c.l.b16 %v1277
    %v1846 = vunpack.c.l.b16 %v1278
    %v1847 = vunpack.c.l.b16 %v1279
    %v1848 = vunpack.c.l.b16 %v1280
    %v1849 = vunpack.c.l.b16 %v1281
    %v1850 = vunpack.c.l.b16 %v1282
    %v1851 = vunpack.c.l.b16 %v1283
    %v1852 = vunpack.c.l.b16 %v1284
    %v1853 = vunpack.c.l.b16 %v1285
    %v1854 = vunpack.c.l.b16 %v1286
    %v1855 = vunpack.c.l.b16 %v1287
    %v1856 = vunpack.c.l.b16 %v1288
    %v1857 = vunpack.c.l.b16 %v1289
    %v1858 = vunpack.c.l.b16 %v1290
    %v1859 = vunpack.c.l.b16 %v1291
    %v1860 = vunpack.c.l.b16 %v1292
    %v1861 = vunpack.c.l.b16 %v1293
    %v1862 = vunpack.c.l.b16 %v1294
    %v1863 = vunpack.c.l.b16 %v1295
    %v1864 = vunpack.c.l.b16 %v1296
    %v1865 = vunpack.c.l.b16 %v1297
    %v1866 = vunpack.c.l.b16 %v1298
    %v1867 = vunpack.c.l.b16 %v1299
    %v1868 = vunpack.c.l.b16 %v1300
    %v1869 = vunpack.c.l.b16 %v1301
    %v1870 = vunpack.c.l.b16 %v1302
    %v1871 = vunpack.c.l.b16 %v1303
    %v1872 = vunpack.c.l.b16 %v1304
    %v1873 = vunpack.c.l.b16 %v1305
    %v1874 = vunpack.c.l.b16 %v1306
    %v1875 = vunpack.c.l.b16 %v1307
    %v1876 = vunpack.c.l.b16 %v1308
    %v1877 = vunpack.c.l.b16 %v1309
    %v1878 = vunpack.c.l.b16 %v1310
    %v1879 = vunpack.c.l.b16 %v1311
    %v1880 = vunpack.c.l.b16 %v1312
    %v1881 = vunpack.c.l.b16 %v1313
    %v1882 = vunpack.c.l.b16 %v1314
    %v1883 = vunpack.c.l.b16 %v1315
    %v1884 = vunpack.c.l.b16 %v1316
    %v1885 = vunpack.c.l.b16 %v1317
    %v1886 = vunpack.c.l.b16 %v1318
    %v1887 = vunpack.c.l.b16 %v1319
    %v1888 = vunpack.c.l.b16 %v1320
    %v1889 = vunpack.c.l.b16 %v1321
    %v1890 = vunpack.c.l.b16 %v1322
    %v1891 = vunpack.c.l.b16 %v1323
    %v1892 = vunpack.c.l.b16 %v1324
    %v1893 = vunpack.c.l.b16 %v1325
    %v1894 = vunpack.c.l.b16 %v1326
    %v1895 = vunpack.c.l.b16 %v1327
    %v1896 = vunpack.c.l.b16 %v1328
    %v1897 = vunpack.c.l.b16 %v1329
    %v1898 = vunpack.c.l.b16 %v1330
    %v1899 = vunpack.c.l.b16 %v1331
    %v1900 = vunpack.c.l.b16 %v1332
    %v1901 = vunpack.c.l.b16 %v1333
    %v1902 = vunpack.c.l.b16 %v1334
    %v1903 = vunpack.c.l.b16 %v1335
    %v1904 = vunpack.c.l.b16 %v1336
    %v1905 = vunpack.c.l.b16 %v1337
    %v1906 = vunpack.c.l.b16 %v1338
    %v1907 = vunpack.c.l.b16 %v1339
    %v1908 = vunpack.c.l.b16 %v1340
    %v1909 = vunpack.c.l.b16 %v1341
    %v1910 = vunpack.c.l.b16 %v1342
    %v1911 = vunpack.c.l.b16 %v1343
    %v1912 = vunpack.c.l.b16 %v1344
    %v1913 = vunpack.c.l.b16 %v1345
    %v1914 = vunpack.c.l.b16 %v1346
    %v1915 = vunpack.c.l.b16 %v1347
    %v1916 = vunpack.c.l.b16 %v1348
    %v1917 = vunpack.c.l.b16 %v1349
    %v1918 = vunpack.c.l.b16 %v1350
    %v1919 = vunpack.c.l.b16 %v1351
    %v1920 = vunpack.c.l.b16 %v1352
    %v1921 = vunpack.c.l.b16 %v1353
    %v1922 = vunpack.c.l.b16 %v1354
    %v1923 = vunpack.c.l.b16 %v1355
    %v1924 = vunpack.c.l.b16 %v1356
    %v1925 = vunpack.c.l.b16 %v1357
    %v1926 = vunpack.c.l.b16 %v1358
    %v1927 = vunpack.c.l.b16 %v1359
    %v1928 = vunpack.c.l.b16 %v1360
    %v1929 = vunpack.c.l.b16 %v1361
    %v1930 = vunpack.c.l.b16 %v1362
    %v1931 = vunpack.c.l.b16 %v1363
    %v1932 = vunpack.c.l.b16 %v1364
    %v1933 = vunpack.c.l.b16 %v1365
    %v1934 = vunpack.c.l.b16 %v1366
    %v1935 = vunpack.c.l.b16 %v1367
    %v1936 = vunpack.c.l.b16 %v1368
    %v1937 = vunpack.c.l.b16 %v1369
    %v1938 = vunpack.c.l.b16 %v1370
    %v1939 = vunpack.c.l.b16 %v1371
    %v1940 = vunpack.c.l.b16 %v1372
    %v1941 = vunpack.c.l.b16 %v1373
    %v1942 = vunpack.c.l.b16 %v1374
    %v1943 = vunpack.c.l.b16 %v1375
    %v1944 = vunpack.c.l.b16 %v1376
    %v1945 = vunpack.c.l.b16 %v1377
    %v1946 = vunpack.c.l.b16 %v1378
    %v1947 = vunpack.c.l.b16 %v1379
    %v1948 = vunpack.c.l.b16 %v1380
    %v1949 = vunpack.c.l.b16 %v1381
    %v1950 = vunpack.c.l.b16 %v1382
    %v1951 = vunpack.c.l.b16 %v1383
    %v1952 = vunpack.c.l.b16 %v1384
    %v1953 = vunpack.c.l.b16 %v1385
    %v1954 = vunpack.c.l.b16 %v1386
    %v1955 = vunpack.c.l.b16 %v1387
    %v1956 = vunpack.c.l.b16 %v1388
    %v1957 = vunpack.c.l.b16 %v1389
    %v1958 = vunpack.c.l.b16 %v1390
    %v1959 = vunpack.c.l.b16 %v1391
    %v1960 = vunpack.c.l.b16 %v1392
    %v1961 = vunpack.c.l.b16 %v1393
    %v1962 = vunpack.c.l.b16 %v1394
    %v1963 = vunpack.c.l.b16 %v1395
    %v1964 = vunpack.c.l.b16 %v1396
    %v1965 = vunpack.c.l.b16 %v1397
    %v1966 = vunpack.c.l.b16 %v1398
    %v1967 = vunpack.c.l.b16 %v1399
    %v1968 = vunpack.c.l.b16 %v1400
    %v1969 = vunpack.c.l.b16 %v1401
    %v1970 = vunpack.c.l.b16 %v1402
    %v1971 = vunpack.c.l.b16 %v1403
    %v1972 = vunpack.c.l.b16 %v1404
    %v1973 = vunpack.c.l.b16 %v1405
    %v1974 = vunpack.c.l.b16 %v1406
    %v1975 = vunpack.c.l.b16 %v1407
    %v1976 = vunpack.c.l.b16 %v1408
    %v1977 = vunpack.c.l.b16 %v1409
    %v1978 = vunpack.c.l.b16 %v1410
    %v1979 = vunpack.c.l.b16 %v1411
    %v1980 = vunpack.c.l.b16 %v1412
    %v1981 = vunpack.c.l.b16 %v1413
    %v1982 = vunpack.c.l.b16 %v1414
    %v1983 = vunpack.c.l.b16 %v1415
    %v1984 = vunpack.c.l.b16 %v1416
    %v1985 = vunpack.c.l.b16 %v1417
    %v1986 = vunpack.c.l.b16 %v1418
    %v1987 = vunpack.c.l.b16 %v1419
    %v1988 = vunpack.c.l.b16 %v1420
    %v1989 = vunpack.c.l.b16 %v1421
    %v1990 = vunpack.c.l.b16 %v1422
    %v1991 = vunpack.c.l.b16 %v1423
    %v1992 = vunpack.c.l.b16 %v1424
    %v1993 = vunpack.c.l.b16 %v1425
    %v1994 = vunpack.c.l.b16 %v1426
    %v1995 = vunpack.c.l.b16 %v1427
    %v1996 = vunpack.c.l.b16 %v1428
    %v1997 = vpack.c.b16 %v1742, %v1741
    %v1998 = vpack.c.b16 %v1744, %v1743
    %v1999 = vpack.c.b16 %v1746, %v1745
    %v2000 = vpack.c.b16 %v1748, %v1747
    %v2001 = vpack.c.b16 %v1750, %v1749
    %v2002 = vpack.c.b16 %v1752, %v1751
    %v2003 = vpack.c.b16 %v1754, %v1753
    %v2004 = vpack.c.b16 %v1756, %v1755
    %v2005 = vpack.c.b16 %v1758, %v1757
    %v2006 = vpack.c.b16 %v1760, %v1759
    %v2007 = vpack.c.b16 %v1762, %v1761
    %v2008 = vpack.c.b16 %v1764, %v1763
    %v2009 = vpack.c.b16 %v1766, %v1765
    %v2010 = vpack.c.b16 %v1768, %v1767
    %v2011 = vpack.c.b16 %v1770, %v1769
    %v2012 = vpack.c.b16 %v1772, %v1771
    %v2013 = vpack.c.b16 %v1774, %v1773
    %v2014 = vpack.c.b16 %v1776, %v1775
    %v2015 = vpack.c.b16 %v1778, %v1777
    %v2016 = vpack.c.b16 %v1780, %v1779
    %v2017 = vpack.c.b16 %v1782, %v1781
    %v2018 = vpack.c.b16 %v1784, %v1783
    %v2019 = vpack.c.b16 %v1786, %v1785
    %v2020 = vpack.c.b16 %v1788, %v1787
    %v2021 = vpack.c.b16 %v1790, %v1789
    %v2022 = vpack.c.b16 %v1792, %v1791
    %v2023 = vpack.c.b16 %v1794, %v1793
    %v2024 = vpack.c.b16 %v1796, %v1795
    %v2025 = vpack.c.b16 %v1798, %v1797
    %v2026 = vpack.c.b16 %v1800, %v1799
    %v2027 = vpack.c.b16 %v1802, %v1801
    %v2028 = vpack.c.b16 %v1804, %v1803
    %v2029 = vpack.c.b16 %v1806, %v1805
    %v2030 = vpack.c.b16 %v1808, %v1807
    %v2031 = vpack.c.b16 %v1810, %v1809
    %v2032 = vpack.c.b16 %v1812, %v1811
    %v2033 = vpack.c.b16 %v1814, %v1813
    %v2034 = vpack.c.b16 %v1816, %v1815
    %v2035 = vpack.c.b16 %v1818, %v1817
    %v2036 = vpack.c.b16 %v1820, %v1819
    %v2037 = vpack.c.b16 %v1822, %v1821
    %v2038 = vpack.c.b16 %v1824, %v1823
    %v2039 = vpack.c.b16 %v1826, %v1825
    %v2040 = vpack.c.b16 %v1828, %v1827
    %v2041 = vpack.c.b16 %v1830, %v1829
    %v2042 = vpack.c.b16 %v1832, %v1831
    %v2043 = vpack.c.b16 %v1834, %v1833
    %v2044 = vpack.c.b16 %v1836, %v1835
    %v2045 = vpack.c.b16 %v1838, %v1837
    %v2046 = vpack.c.b16 %v1840, %v1839
    %v2047 = vpack.c.b16 %v1842, %v1841
    %v2048 = vpack.c.b16 %v1844, %v1843
    %v2049 = vpack.c.b16 %v1846, %v1845
    %v2050 = vpack.c.b16 %v1848, %v1847
    %v2051 = vpack.c.b16 %v1850, %v1849
    %v2052 = vpack.c.b16 %v1852, %v1851
    %v2053 = vpack.c.b16 %v1854, %v1853
    %v2054 = vpack.c.b16 %v1856, %v1855
    %v2055 = vpack.c.b16 %v1858, %v1857
    %v2056 = vpack.c.b16 %v1860, %v1859
    %v2057 = vpack.c.b16 %v1862, %v1861
    %v2058 = vpack.c.b16 %v1864, %v1863
    %v2059 = vpack.c.b16 %v1866, %v1865
    %v2060 = vpack.c.b16 %v1868, %v1867
    %v2061 = vpack.c.b16 %v1870, %v1869
    %v2062 = vpack.c.b16 %v1872, %v1871
    %v2063 = vpack.c.b16 %v1874, %v1873
    %v2064 = vpack.c.b16 %v1876, %v1875
    %v2065 = vpack.c.b16 %v1878, %v1877
    %v2066 = vpack.c.b16 %v1880, %v1879
    %v2067 = vpack.c.b16 %v1882, %v1881
    %v2068 = vpack.c.b16 %v1884, %v1883
    %v2069 = vpack.c.b16 %v1886, %v1885
    %v2070 = vpack.c.b16 %v1888, %v1887
    %v2071 = vpack.c.b16 %v1890, %v1889
    %v2072 = vpack.c.b16 %v1892, %v1891
    %v2073 = vpack.c.b16 %v1894, %v1893
    %v2074 = vpack.c.b16 %v1896, %v1895
    %v2075 = vpack.c.b16 %v1898, %v1897
    %v2076 = vpack.c.b16 %v1900, %v1899
    %v2077 = vpack.c.b16 %v1902, %v1901
    %v2078 = vpack.c.b16 %v1904, %v1903
    %v2079 = vpack.c.b16 %v1906, %v1905
    %v2080 = vpack.c.b16 %v1908, %v1907
    %v2081 = vpack.c.b16 %v1910, %v1909
    %v2082 = vpack.c.b16 %v1912, %v1911
    %v2083 = vpack.c.b16 %v1914, %v1913
    %v2084 = vpack.c.b16 %v1916, %v1915
    %v2085 = vpack.c.b16 %v1918, %v1917
    %v2086 = vpack.c.b16 %v1920, %v1919
    %v2087 = vpack.c.b16 %v1922, %v1921
    %v2088 = vpack.c.b16 %v1924, %v1923
    %v2089 = vpack.c.b16 %v1926, %v1925
    %v2090 = vpack.c.b16 %v1928, %v1927
    %v2091 = vpack.c.b16 %v1930, %v1929
    %v2092 = vpack.c.b16 %v1932, %v1931
    %v2093 = vpack.c.b16 %v1934, %v1933
    %v2094 = vpack.c.b16 %v1936, %v1935
    %v2095 = vpack.c.b16 %v1938, %v1937
    %v2096 = vpack.c.b16 %v1940, %v1939
    %v2097 = vpack.c.b16 %v1942, %v1941
    %v2098 = vpack.c.b16 %v1944, %v1943
    %v2099 = vpack.c.b16 %v1946, %v1945
    %v2100 = vpack.c.b16 %v1948, %v1947
    %v2101 = vpack.c.b16 %v1950, %v1949
    %v2102 = vpack.c.b16 %v1952, %v1951
    %v2103 = vpack.c.b16 %v1954, %v1953
    %v2104 = vpack.c.b16 %v1956, %v1955
    %v2105 = vpack.c.b16 %v1958, %v1957
    %v2106 = vpack.c.b16 %v1960, %v1959
    %v2107 = vpack.c.b16 %v1962, %v1961
    %v2108 = vpack.c.b16 %v1964, %v1963
    %v2109 = vpack.c.b16 %v1966, %v1965
    %v2110 = vpack.c.b16 %v1968, %v1967
    %v2111 = vpack.c.b16 %v1970, %v1969
    %v2112 = vpack.c.b16 %v1972, %v1971
    %v2113 = vpack.c.b16 %v1974, %v1973
    %v2114 = vpack.c.b16 %v1976, %v1975
    %v2115 = vpack.c.b16 %v1978, %v1977
    %v2116 = vpack.c.b16 %v1980, %v1979
    %v2117 = vpack.c.b16 %v1982, %v1981
    %v2118 = vpack.c.b16 %v1984, %v1983
    %v2119 = vpack.c.b16 %v1986, %v1985
    %v2120 = vpack.c.b16 %v1988, %v1987
    %v2121 = vpack.c.b16 %v1990, %v1989
    %v2122 = vpack.c.b16 %v1992, %v1991
    %v2123 = vpack.c.b16 %v1994, %v1993
    %v2124 = vpack.c.b16 %v1996, %v1995
    %2253 = vmatpush.bf16.msra.mxu0 %v2004
    %2254 = vmatpush.bf16.msra.mxu0 %v2003
    %2255 = vmatpush.bf16.msra.mxu0 %v2002
    %2256 = vmatpush.bf16.msra.mxu0 %v2001
    %2257 = vmatpush.bf16.msra.mxu0 %v2000
    %2258 = vmatpush.bf16.msra.mxu0 %v1999
    %2259 = vmatpush.bf16.msra.mxu0 %v1998
    %2260 = vmatpush.bf16.msra.mxu0 %v1997
    %2261 = vmatmul.bf16.gmra.mxu0 %v1453
    %v2262 = vpop.f32.mrf.mxu0
    %v2263 = vadd.f32 0.0, %v2262
    %v2264 = vpop.f32.mrf.mxu0
    %2265 = vdwg.mxu0
    %2266 = vmatpush.bf16.msra.mxu0 %v2012
    %2267 = vmatpush.bf16.msra.mxu0 %v2011
    %2268 = vmatpush.bf16.msra.mxu0 %v2010
    %2269 = vmatpush.bf16.msra.mxu0 %v2009
    %2270 = vmatpush.bf16.msra.mxu0 %v2008
    %2271 = vmatpush.bf16.msra.mxu0 %v2007
    %2272 = vmatpush.bf16.msra.mxu0 %v2006
    %2273 = vmatpush.bf16.msra.mxu0 %v2005
    %2274 = vmatmul.bf16.gmra.mxu0 %v1454
    %v2275 = vpop.f32.mrf.mxu0
    %v2276 = vadd.f32 %v2263, %v2275
    %v2277 = vpop.f32.mrf.mxu0
    %2278 = vdwg.mxu0
    %2279 = vmatpush.bf16.msra.mxu0 %v2020
    %2280 = vmatpush.bf16.msra.mxu0 %v2019
    %2281 = vmatpush.bf16.msra.mxu0 %v2018
    %2282 = vmatpush.bf16.msra.mxu0 %v2017
    %2283 = vmatpush.bf16.msra.mxu0 %v2016
    %2284 = vmatpush.bf16.msra.mxu0 %v2015
    %2285 = vmatpush.bf16.msra.mxu0 %v2014
    %2286 = vmatpush.bf16.msra.mxu0 %v2013
    %2287 = vmatmul.bf16.gmra.mxu0 %v1455
    %v2288 = vpop.f32.mrf.mxu0
    %v2289 = vadd.f32 %v2276, %v2288
    %v2290 = vpop.f32.mrf.mxu0
    %2291 = vdwg.mxu0
    %2292 = vmatpush.bf16.msra.mxu0 %v2028
    %2293 = vmatpush.bf16.msra.mxu0 %v2027
    %2294 = vmatpush.bf16.msra.mxu0 %v2026
    %2295 = vmatpush.bf16.msra.mxu0 %v2025
    %2296 = vmatpush.bf16.msra.mxu0 %v2024
    %2297 = vmatpush.bf16.msra.mxu0 %v2023
    %2298 = vmatpush.bf16.msra.mxu0 %v2022
    %2299 = vmatpush.bf16.msra.mxu0 %v2021
    %2300 = vmatmul.bf16.gmra.mxu0 %v1456
    %v2301 = vpop.f32.mrf.mxu0
    %v2302 = vadd.f32 %v2289, %v2301
    %v2303 = vpop.f32.mrf.mxu0
    %2304 = vdwg.mxu0
    %2305 = vmatpush.bf16.msra.mxu0 %v2036
    %2306 = vmatpush.bf16.msra.mxu0 %v2035
    %2307 = vmatpush.bf16.msra.mxu0 %v2034
    %2308 = vmatpush.bf16.msra.mxu0 %v2033
    %2309 = vmatpush.bf16.msra.mxu0 %v2032
    %2310 = vmatpush.bf16.msra.mxu0 %v2031
    %2311 = vmatpush.bf16.msra.mxu0 %v2030
    %2312 = vmatpush.bf16.msra.mxu0 %v2029
    %2313 = vmatmul.bf16.gmra.mxu0 %v1457
    %v2314 = vpop.f32.mrf.mxu0
    %v2315 = vadd.f32 %v2302, %v2314
    %v2316 = vpop.f32.mrf.mxu0
    %2317 = vdwg.mxu0
    %2318 = vmatpush.bf16.msra.mxu0 %v2044
    %2319 = vmatpush.bf16.msra.mxu0 %v2043
    %2320 = vmatpush.bf16.msra.mxu0 %v2042
    %2321 = vmatpush.bf16.msra.mxu0 %v2041
    %2322 = vmatpush.bf16.msra.mxu0 %v2040
    %2323 = vmatpush.bf16.msra.mxu0 %v2039
    %2324 = vmatpush.bf16.msra.mxu0 %v2038
    %2325 = vmatpush.bf16.msra.mxu0 %v2037
    %2326 = vmatmul.bf16.gmra.mxu0 %v1458
    %v2327 = vpop.f32.mrf.mxu0
    %v2328 = vadd.f32 %v2315, %v2327
    %v2329 = vpop.f32.mrf.mxu0
    %2330 = vdwg.mxu0
    %2331 = vmatpush.bf16.msra.mxu0 %v2052
    %2332 = vmatpush.bf16.msra.mxu0 %v2051
    %2333 = vmatpush.bf16.msra.mxu0 %v2050
    %2334 = vmatpush.bf16.msra.mxu0 %v2049
    %2335 = vmatpush.bf16.msra.mxu0 %v2048
    %2336 = vmatpush.bf16.msra.mxu0 %v2047
    %2337 = vmatpush.bf16.msra.mxu0 %v2046
    %2338 = vmatpush.bf16.msra.mxu0 %v2045
    %2339 = vmatmul.bf16.gmra.mxu0 %v1459
    %v2340 = vpop.f32.mrf.mxu0
    %v2341 = vadd.f32 %v2328, %v2340
    %v2342 = vpop.f32.mrf.mxu0
    %2343 = vdwg.mxu0
    %2344 = vmatpush.bf16.msra.mxu0 %v2060
    %2345 = vmatpush.bf16.msra.mxu0 %v2059
    %2346 = vmatpush.bf16.msra.mxu0 %v2058
    %2347 = vmatpush.bf16.msra.mxu0 %v2057
    %2348 = vmatpush.bf16.msra.mxu0 %v2056
    %2349 = vmatpush.bf16.msra.mxu0 %v2055
    %2350 = vmatpush.bf16.msra.mxu0 %v2054
    %2351 = vmatpush.bf16.msra.mxu0 %v2053
    %2352 = vmatmul.bf16.gmra.mxu0 %v1460
    %v2353 = vpop.f32.mrf.mxu0
    %v2354 = vadd.f32 %v2341, %v2353
    %v2355 = vpop.f32.mrf.mxu0
    %2356 = vdwg.mxu0
    %2357 = vmatpush.bf16.msra.mxu0 %v2068
    %2358 = vmatpush.bf16.msra.mxu0 %v2067
    %2359 = vmatpush.bf16.msra.mxu0 %v2066
    %2360 = vmatpush.bf16.msra.mxu0 %v2065
    %2361 = vmatpush.bf16.msra.mxu0 %v2064
    %2362 = vmatpush.bf16.msra.mxu0 %v2063
    %2363 = vmatpush.bf16.msra.mxu0 %v2062
    %2364 = vmatpush.bf16.msra.mxu0 %v2061
    %2365 = vmatmul.bf16.gmra.mxu0 %v1461
    %v2366 = vpop.f32.mrf.mxu0
    %v2367 = vadd.f32 %v2354, %v2366
    %v2368 = vpop.f32.mrf.mxu0
    %2369 = vdwg.mxu0
    %2370 = vmatpush.bf16.msra.mxu0 %v2076
    %2371 = vmatpush.bf16.msra.mxu0 %v2075
    %2372 = vmatpush.bf16.msra.mxu0 %v2074
    %2373 = vmatpush.bf16.msra.mxu0 %v2073
    %2374 = vmatpush.bf16.msra.mxu0 %v2072
    %2375 = vmatpush.bf16.msra.mxu0 %v2071
    %2376 = vmatpush.bf16.msra.mxu0 %v2070
    %2377 = vmatpush.bf16.msra.mxu0 %v2069
    %2378 = vmatmul.bf16.gmra.mxu0 %v1462
    %v2379 = vpop.f32.mrf.mxu0
    %v2380 = vadd.f32 %v2367, %v2379
    %v2381 = vpop.f32.mrf.mxu0
    %2382 = vdwg.mxu0
    %2383 = vmatpush.bf16.msra.mxu0 %v2084
    %2384 = vmatpush.bf16.msra.mxu0 %v2083
    %2385 = vmatpush.bf16.msra.mxu0 %v2082
    %2386 = vmatpush.bf16.msra.mxu0 %v2081
    %2387 = vmatpush.bf16.msra.mxu0 %v2080
    %2388 = vmatpush.bf16.msra.mxu0 %v2079
    %2389 = vmatpush.bf16.msra.mxu0 %v2078
    %2390 = vmatpush.bf16.msra.mxu0 %v2077
    %2391 = vmatmul.bf16.gmra.mxu0 %v1463
    %v2392 = vpop.f32.mrf.mxu0
    %v2393 = vadd.f32 %v2380, %v2392
    %v2394 = vpop.f32.mrf.mxu0
    %2395 = vdwg.mxu0
    %2396 = vmatpush.bf16.msra.mxu0 %v2092
    %2397 = vmatpush.bf16.msra.mxu0 %v2091
    %2398 = vmatpush.bf16.msra.mxu0 %v2090
    %2399 = vmatpush.bf16.msra.mxu0 %v2089
    %2400 = vmatpush.bf16.msra.mxu0 %v2088
    %2401 = vmatpush.bf16.msra.mxu0 %v2087
    %2402 = vmatpush.bf16.msra.mxu0 %v2086
    %2403 = vmatpush.bf16.msra.mxu0 %v2085
    %2404 = vmatmul.bf16.gmra.mxu0 %v1464
    %v2405 = vpop.f32.mrf.mxu0
    %v2406 = vadd.f32 %v2393, %v2405
    %v2407 = vpop.f32.mrf.mxu0
    %2408 = vdwg.mxu0
    %2409 = vmatpush.bf16.msra.mxu0 %v2100
    %2410 = vmatpush.bf16.msra.mxu0 %v2099
    %2411 = vmatpush.bf16.msra.mxu0 %v2098
    %2412 = vmatpush.bf16.msra.mxu0 %v2097
    %2413 = vmatpush.bf16.msra.mxu0 %v2096
    %2414 = vmatpush.bf16.msra.mxu0 %v2095
    %2415 = vmatpush.bf16.msra.mxu0 %v2094
    %2416 = vmatpush.bf16.msra.mxu0 %v2093
    %2417 = vmatmul.bf16.gmra.mxu0 %v1465
    %v2418 = vpop.f32.mrf.mxu0
    %v2419 = vadd.f32 %v2406, %v2418
    %v2420 = vpop.f32.mrf.mxu0
    %2421 = vdwg.mxu0
    %2422 = vmatpush.bf16.msra.mxu0 %v2108
    %2423 = vmatpush.bf16.msra.mxu0 %v2107
    %2424 = vmatpush.bf16.msra.mxu0 %v2106
    %2425 = vmatpush.bf16.msra.mxu0 %v2105
    %2426 = vmatpush.bf16.msra.mxu0 %v2104
    %2427 = vmatpush.bf16.msra.mxu0 %v2103
    %2428 = vmatpush.bf16.msra.mxu0 %v2102
    %2429 = vmatpush.bf16.msra.mxu0 %v2101
    %2430 = vmatmul.bf16.gmra.mxu0 %v1466
    %v2431 = vpop.f32.mrf.mxu0
    %v2432 = vadd.f32 %v2419, %v2431
    %v2433 = vpop.f32.mrf.mxu0
    %2434 = vdwg.mxu0
    %2435 = vmatpush.bf16.msra.mxu0 %v2116
    %2436 = vmatpush.bf16.msra.mxu0 %v2115
    %2437 = vmatpush.bf16.msra.mxu0 %v2114
    %2438 = vmatpush.bf16.msra.mxu0 %v2113
    %2439 = vmatpush.bf16.msra.mxu0 %v2112
    %2440 = vmatpush.bf16.msra.mxu0 %v2111
    %2441 = vmatpush.bf16.msra.mxu0 %v2110
    %2442 = vmatpush.bf16.msra.mxu0 %v2109
    %2443 = vmatmul.bf16.gmra.mxu0 %v1467
    %v2444 = vpop.f32.mrf.mxu0
    %v2445 = vadd.f32 %v2432, %v2444
    %v2446 = vpop.f32.mrf.mxu0
    %2447 = vdwg.mxu0
    %2448 = vmatpush.bf16.msra.mxu0 %v2124
    %2449 = vmatpush.bf16.msra.mxu0 %v2123
    %2450 = vmatpush.bf16.msra.mxu0 %v2122
    %2451 = vmatpush.bf16.msra.mxu0 %v2121
    %2452 = vmatpush.bf16.msra.mxu0 %v2120
    %2453 = vmatpush.bf16.msra.mxu0 %v2119
    %2454 = vmatpush.bf16.msra.mxu0 %v2118
    %2455 = vmatpush.bf16.msra.mxu0 %v2117
    %2456 = vmatmul.bf16.gmra.mxu0 %v1468
    %v2457 = vpop.f32.mrf.mxu0
    %v2458 = vadd.f32 %v2445, %v2457
    %v2459 = vpop.f32.mrf.mxu0
    %2460 = vdwg.mxu0
    %v2469 = vunpack.c.l.b16 %v1165
    %v2470 = vunpack.c.h.b16 %v1165
    %v2471 = vunpack.c.l.b16 %v1166
    %v2472 = vunpack.c.h.b16 %v1166
    %v2473 = vunpack.c.l.b16 %v1167
    %v2474 = vunpack.c.h.b16 %v1167
    %v2475 = vunpack.c.l.b16 %v1168
    %v2476 = vunpack.c.h.b16 %v1168
    %v2477 = vunpack.c.l.b16 %v1169
    %v2478 = vunpack.c.h.b16 %v1169
    %v2479 = vunpack.c.l.b16 %v1170
    %v2480 = vunpack.c.h.b16 %v1170
    %v2481 = vunpack.c.l.b16 %v1171
    %v2482 = vunpack.c.h.b16 %v1171
    %v2483 = vunpack.c.l.b16 %v1172
    %v2484 = vunpack.c.h.b16 %v1172
    %v2485 = vpack.c.b16 %v2469, %v2469
    %v2486 = vpack.c.b16 %v2470, %v2470
    %v2487 = vpack.c.b16 %v2471, %v2471
    %v2488 = vpack.c.b16 %v2472, %v2472
    %v2489 = vpack.c.b16 %v2473, %v2473
    %v2490 = vpack.c.b16 %v2474, %v2474
    %v2491 = vpack.c.b16 %v2475, %v2475
    %v2492 = vpack.c.b16 %v2476, %v2476
    %v2493 = vpack.c.b16 %v2477, %v2477
    %v2494 = vpack.c.b16 %v2478, %v2478
    %v2495 = vpack.c.b16 %v2479, %v2479
    %v2496 = vpack.c.b16 %v2480, %v2480
    %v2497 = vpack.c.b16 %v2481, %v2481
    %v2498 = vpack.c.b16 %v2482, %v2482
    %v2499 = vpack.c.b16 %v2483, %v2483
    %v2500 = vpack.c.b16 %v2484, %v2484
    %2517 = vmatpush.bf16.msra.mxu0 %v2004
    %2518 = vmatpush.bf16.msra.mxu0 %v2003
    %2519 = vmatpush.bf16.msra.mxu0 %v2002
    %2520 = vmatpush.bf16.msra.mxu0 %v2001
    %2521 = vmatpush.bf16.msra.mxu0 %v2000
    %2522 = vmatpush.bf16.msra.mxu0 %v1999
    %2523 = vmatpush.bf16.msra.mxu0 %v1998
    %2524 = vmatpush.bf16.msra.mxu0 %v1997
    %2525 = vmatmul.bf16.gmra.mxu0 %v2485
    %v2526 = vpop.f32.mrf.mxu0
    %v2527 = vadd.f32 0.0, %v2526
    %v2528 = vpop.f32.mrf.mxu0
    %2529 = vdwg.mxu0
    %2530 = vmatpush.bf16.msra.mxu0 %v2012
    %2531 = vmatpush.bf16.msra.mxu0 %v2011
    %2532 = vmatpush.bf16.msra.mxu0 %v2010
    %2533 = vmatpush.bf16.msra.mxu0 %v2009
    %2534 = vmatpush.bf16.msra.mxu0 %v2008
    %2535 = vmatpush.bf16.msra.mxu0 %v2007
    %2536 = vmatpush.bf16.msra.mxu0 %v2006
    %2537 = vmatpush.bf16.msra.mxu0 %v2005
    %2538 = vmatmul.bf16.gmra.mxu0 %v2486
    %v2539 = vpop.f32.mrf.mxu0
    %v2540 = vadd.f32 %v2527, %v2539
    %v2541 = vpop.f32.mrf.mxu0
    %2542 = vdwg.mxu0
    %2543 = vmatpush.bf16.msra.mxu0 %v2020
    %2544 = vmatpush.bf16.msra.mxu0 %v2019
    %2545 = vmatpush.bf16.msra.mxu0 %v2018
    %2546 = vmatpush.bf16.msra.mxu0 %v2017
    %2547 = vmatpush.bf16.msra.mxu0 %v2016
    %2548 = vmatpush.bf16.msra.mxu0 %v2015
    %2549 = vmatpush.bf16.msra.mxu0 %v2014
    %2550 = vmatpush.bf16.msra.mxu0 %v2013
    %2551 = vmatmul.bf16.gmra.mxu0 %v2487
    %v2552 = vpop.f32.mrf.mxu0
    %v2553 = vadd.f32 %v2540, %v2552
    %v2554 = vpop.f32.mrf.mxu0
    %2555 = vdwg.mxu0
    %2556 = vmatpush.bf16.msra.mxu0 %v2028
    %2557 = vmatpush.bf16.msra.mxu0 %v2027
    %2558 = vmatpush.bf16.msra.mxu0 %v2026
    %2559 = vmatpush.bf16.msra.mxu0 %v2025
    %2560 = vmatpush.bf16.msra.mxu0 %v2024
    %2561 = vmatpush.bf16.msra.mxu0 %v2023
    %2562 = vmatpush.bf16.msra.mxu0 %v2022
    %2563 = vmatpush.bf16.msra.mxu0 %v2021
    %2564 = vmatmul.bf16.gmra.mxu0 %v2488
    %v2565 = vpop.f32.mrf.mxu0
    %v2566 = vadd.f32 %v2553, %v2565
    %v2567 = vpop.f32.mrf.mxu0
    %2568 = vdwg.mxu0
    %2569 = vmatpush.bf16.msra.mxu0 %v2036
    %2570 = vmatpush.bf16.msra.mxu0 %v2035
    %2571 = vmatpush.bf16.msra.mxu0 %v2034
    %2572 = vmatpush.bf16.msra.mxu0 %v2033
    %2573 = vmatpush.bf16.msra.mxu0 %v2032
    %2574 = vmatpush.bf16.msra.mxu0 %v2031
    %2575 = vmatpush.bf16.msra.mxu0 %v2030
    %2576 = vmatpush.bf16.msra.mxu0 %v2029
    %2577 = vmatmul.bf16.gmra.mxu0 %v2489
    %v2578 = vpop.f32.mrf.mxu0
    %v2579 = vadd.f32 %v2566, %v2578
    %v2580 = vpop.f32.mrf.mxu0
    %2581 = vdwg.mxu0
    %2582 = vmatpush.bf16.msra.mxu0 %v2044
    %2583 = vmatpush.bf16.msra.mxu0 %v2043
    %2584 = vmatpush.bf16.msra.mxu0 %v2042
    %2585 = vmatpush.bf16.msra.mxu0 %v2041
    %2586 = vmatpush.bf16.msra.mxu0 %v2040
    %2587 = vmatpush.bf16.msra.mxu0 %v2039
    %2588 = vmatpush.bf16.msra.mxu0 %v2038
    %2589 = vmatpush.bf16.msra.mxu0 %v2037
    %2590 = vmatmul.bf16.gmra.mxu0 %v2490
    %v2591 = vpop.f32.mrf.mxu0
    %v2592 = vadd.f32 %v2579, %v2591
    %v2593 = vpop.f32.mrf.mxu0
    %2594 = vdwg.mxu0
    %2595 = vmatpush.bf16.msra.mxu0 %v2052
    %2596 = vmatpush.bf16.msra.mxu0 %v2051
    %2597 = vmatpush.bf16.msra.mxu0 %v2050
    %2598 = vmatpush.bf16.msra.mxu0 %v2049
    %2599 = vmatpush.bf16.msra.mxu0 %v2048
    %2600 = vmatpush.bf16.msra.mxu0 %v2047
    %2601 = vmatpush.bf16.msra.mxu0 %v2046
    %2602 = vmatpush.bf16.msra.mxu0 %v2045
    %2603 = vmatmul.bf16.gmra.mxu0 %v2491
    %v2604 = vpop.f32.mrf.mxu0
    %v2605 = vadd.f32 %v2592, %v2604
    %v2606 = vpop.f32.mrf.mxu0
    %2607 = vdwg.mxu0
    %2608 = vmatpush.bf16.msra.mxu0 %v2060
    %2609 = vmatpush.bf16.msra.mxu0 %v2059
    %2610 = vmatpush.bf16.msra.mxu0 %v2058
    %2611 = vmatpush.bf16.msra.mxu0 %v2057
    %2612 = vmatpush.bf16.msra.mxu0 %v2056
    %2613 = vmatpush.bf16.msra.mxu0 %v2055
    %2614 = vmatpush.bf16.msra.mxu0 %v2054
    %2615 = vmatpush.bf16.msra.mxu0 %v2053
    %2616 = vmatmul.bf16.gmra.mxu0 %v2492
    %v2617 = vpop.f32.mrf.mxu0
    %v2618 = vadd.f32 %v2605, %v2617
    %v2619 = vpop.f32.mrf.mxu0
    %2620 = vdwg.mxu0
    %2621 = vmatpush.bf16.msra.mxu0 %v2068
    %2622 = vmatpush.bf16.msra.mxu0 %v2067
    %2623 = vmatpush.bf16.msra.mxu0 %v2066
    %2624 = vmatpush.bf16.msra.mxu0 %v2065
    %2625 = vmatpush.bf16.msra.mxu0 %v2064
    %2626 = vmatpush.bf16.msra.mxu0 %v2063
    %2627 = vmatpush.bf16.msra.mxu0 %v2062
    %2628 = vmatpush.bf16.msra.mxu0 %v2061
    %2629 = vmatmul.bf16.gmra.mxu0 %v2493
    %v2630 = vpop.f32.mrf.mxu0
    %v2631 = vadd.f32 %v2618, %v2630
    %v2632 = vpop.f32.mrf.mxu0
    %2633 = vdwg.mxu0
    %2634 = vmatpush.bf16.msra.mxu0 %v2076
    %2635 = vmatpush.bf16.msra.mxu0 %v2075
    %2636 = vmatpush.bf16.msra.mxu0 %v2074
    %2637 = vmatpush.bf16.msra.mxu0 %v2073
    %2638 = vmatpush.bf16.msra.mxu0 %v2072
    %2639 = vmatpush.bf16.msra.mxu0 %v2071
    %2640 = vmatpush.bf16.msra.mxu0 %v2070
    %2641 = vmatpush.bf16.msra.mxu0 %v2069
    %2642 = vmatmul.bf16.gmra.mxu0 %v2494
    %v2643 = vpop.f32.mrf.mxu0
    %v2644 = vadd.f32 %v2631, %v2643
    %v2645 = vpop.f32.mrf.mxu0
    %2646 = vdwg.mxu0
    %2647 = vmatpush.bf16.msra.mxu0 %v2084
    %2648 = vmatpush.bf16.msra.mxu0 %v2083
    %2649 = vmatpush.bf16.msra.mxu0 %v2082
    %2650 = vmatpush.bf16.msra.mxu0 %v2081
    %2651 = vmatpush.bf16.msra.mxu0 %v2080
    %2652 = vmatpush.bf16.msra.mxu0 %v2079
    %2653 = vmatpush.bf16.msra.mxu0 %v2078
    %2654 = vmatpush.bf16.msra.mxu0 %v2077
    %2655 = vmatmul.bf16.gmra.mxu0 %v2495
    %v2656 = vpop.f32.mrf.mxu0
    %v2657 = vadd.f32 %v2644, %v2656
    %v2658 = vpop.f32.mrf.mxu0
    %2659 = vdwg.mxu0
    %2660 = vmatpush.bf16.msra.mxu0 %v2092
    %2661 = vmatpush.bf16.msra.mxu0 %v2091
    %2662 = vmatpush.bf16.msra.mxu0 %v2090
    %2663 = vmatpush.bf16.msra.mxu0 %v2089
    %2664 = vmatpush.bf16.msra.mxu0 %v2088
    %2665 = vmatpush.bf16.msra.mxu0 %v2087
    %2666 = vmatpush.bf16.msra.mxu0 %v2086
    %2667 = vmatpush.bf16.msra.mxu0 %v2085
    %2668 = vmatmul.bf16.gmra.mxu0 %v2496
    %v2669 = vpop.f32.mrf.mxu0
    %v2670 = vadd.f32 %v2657, %v2669
    %v2671 = vpop.f32.mrf.mxu0
    %2672 = vdwg.mxu0
    %2673 = vmatpush.bf16.msra.mxu0 %v2100
    %2674 = vmatpush.bf16.msra.mxu0 %v2099
    %2675 = vmatpush.bf16.msra.mxu0 %v2098
    %2676 = vmatpush.bf16.msra.mxu0 %v2097
    %2677 = vmatpush.bf16.msra.mxu0 %v2096
    %2678 = vmatpush.bf16.msra.mxu0 %v2095
    %2679 = vmatpush.bf16.msra.mxu0 %v2094
    %2680 = vmatpush.bf16.msra.mxu0 %v2093
    %2681 = vmatmul.bf16.gmra.mxu0 %v2497
    %v2682 = vpop.f32.mrf.mxu0
    %v2683 = vadd.f32 %v2670, %v2682
    %v2684 = vpop.f32.mrf.mxu0
    %2685 = vdwg.mxu0
    %2686 = vmatpush.bf16.msra.mxu0 %v2108
    %2687 = vmatpush.bf16.msra.mxu0 %v2107
    %2688 = vmatpush.bf16.msra.mxu0 %v2106
    %2689 = vmatpush.bf16.msra.mxu0 %v2105
    %2690 = vmatpush.bf16.msra.mxu0 %v2104
    %2691 = vmatpush.bf16.msra.mxu0 %v2103
    %2692 = vmatpush.bf16.msra.mxu0 %v2102
    %2693 = vmatpush.bf16.msra.mxu0 %v2101
    %2694 = vmatmul.bf16.gmra.mxu0 %v2498
    %v2695 = vpop.f32.mrf.mxu0
    %v2696 = vadd.f32 %v2683, %v2695
    %v2697 = vpop.f32.mrf.mxu0
    %2698 = vdwg.mxu0
    %2699 = vmatpush.bf16.msra.mxu0 %v2116
    %2700 = vmatpush.bf16.msra.mxu0 %v2115
    %2701 = vmatpush.bf16.msra.mxu0 %v2114
    %2702 = vmatpush.bf16.msra.mxu0 %v2113
    %2703 = vmatpush.bf16.msra.mxu0 %v2112
    %2704 = vmatpush.bf16.msra.mxu0 %v2111
    %2705 = vmatpush.bf16.msra.mxu0 %v2110
    %2706 = vmatpush.bf16.msra.mxu0 %v2109
    %2707 = vmatmul.bf16.gmra.mxu0 %v2499
    %v2708 = vpop.f32.mrf.mxu0
    %v2709 = vadd.f32 %v2696, %v2708
    %v2710 = vpop.f32.mrf.mxu0
    %2711 = vdwg.mxu0
    %2712 = vmatpush.bf16.msra.mxu0 %v2124
    %2713 = vmatpush.bf16.msra.mxu0 %v2123
    %2714 = vmatpush.bf16.msra.mxu0 %v2122
    %2715 = vmatpush.bf16.msra.mxu0 %v2121
    %2716 = vmatpush.bf16.msra.mxu0 %v2120
    %2717 = vmatpush.bf16.msra.mxu0 %v2119
    %2718 = vmatpush.bf16.msra.mxu0 %v2118
    %2719 = vmatpush.bf16.msra.mxu0 %v2117
    %2720 = vmatmul.bf16.gmra.mxu0 %v2500
    %v2721 = vpop.f32.mrf.mxu0
    %v2722 = vadd.f32 %v2709, %v2721
    %v2723 = vpop.f32.mrf.mxu0
    %2724 = vdwg.mxu0
    %v2725 = vlaneseq
    %v2726 = vand.u32 %v2725, 127
    %vm2727 = vcmp.lt.s32.totalorder %v2726, 6
    %v2728 = vsel %vm2727, %v2458, %v2722
    %v2729 = vld [vmem:[%s4] sm:$0x1]
    %v2731 = vperm.slane %v2729, 0
    %v2733 = vadd.f32 %v2728, %v2731
    %2734 = vst [vmem:[%s5] sm:$0xff] %v2733
    %vm2735 = vcmp.ge.s32.totalorder %v2726, 6
    %vm2736 = vcmp.lt.s32.totalorder %v2726, 12
    %vm2737 = vmand %vm2735, %vm2736
    %v2738 = vsel %vm2737, %v2733, -1e+30
    %2739 = vmax.xlane.f32.xlu0 %v2738
    %v2740 = vpop.xlane.xlu0 %2739
    %v2741 = vsub.f32 %v2738, %v2740
    %v2742 = vmul.f32 %v2741, 1.442695
    %v2743 = vpow.pop %v2742
    %2744 = vadd.xlane.f32.xlu0 %v2743
    %v2745 = vpop.xlane.xlu0 %2744
    %v2746 = vlog2.pop %v2745
    %v2747 = vmul.f32 %v2746, 0.6931472
    %v2748 = vsub.f32 %v2733, %v2740
    %v2749 = vsub.f32 %v2748, %v2747
    %2750 = vst [vmem:[%s6] sm:$0xff] %v2749
    // Predicated region
    $region30: #{pen_q_forward.1} parent=1 // pred_check
      _
    $region31: #{pen_q_forward.1} parent=1 // pred_check_branch
      %2752 = sbr.rel (0) target = $region33
    $region32: #{pen_q_forward.1} parent=1 // pred_region
      _
    $region33: #{pen_q_forward.1} parent=1 // pred_fallthru
      _
    // Predicated region
    $region34: #{pen_q_forward.1} parent=1 // pred_check
      _
    $region35: #{pen_q_forward.1} parent=1 // pred_check_branch
      %2754 = sbr.rel (0) target = $region37
    $region36: #{pen_q_forward.1} parent=1 // pred_region
      _
    $region37: #{pen_q_forward.1} parent=1 // pred_fallthru
      _
    // Predicated region
    $region38: #{pen_q_forward.1} parent=1 // pred_check
      _
    $region39: #{pen_q_forward.1} parent=1 // pred_check_branch
      %2756 = sbr.rel (0) target = $region41
    $region40: #{pen_q_forward.1} parent=1 // pred_region
      _
    $region41: #{pen_q_forward.1} parent=1 // pred_fallthru
      _
    // Predicated region
    $region42: #{pen_q_forward.1} parent=1 // pred_check
      _
    $region43: #{pen_q_forward.1} parent=1 // pred_check_branch
      %2758 = sbr.rel (0) target = $region45
    $region44: #{pen_q_forward.1} parent=1 // pred_region
      _
    $region45: #{pen_q_forward.1} parent=1 // pred_fallthru
      _
    %2759 = vsyncpa [#allocation3], 1
    %2760 = vsyncpa [#allocation5], 1

</llo_original>
